<compile_context>
chip_gen: v7x
topology: tpu7x:2x2x1
jax: 0.10.0
libtpu: 0.0.40
codegen_flags: <defaults>
</compile_context>

<pallas_src>
import functools

import jax
import jax.numpy as jnp
from jax.experimental import pallas as pl
from jax.experimental.pallas import tpu as pltpu


CP = 128       # lane-padded channel width (output / hidden channels padded to 128)
TILE_N = 128   # target-node row tile
TILE_K = 256   # reduction tile over the flattened (source_node * edge_type) axis


def _round_up(n, m):
    return ((n + m - 1) // m) * m


# ----------------------------- Pallas kernels -----------------------------

def msg_root_kernel(x_ref, wrel_ref, wroot_ref, b_ref, mask_ref,
                    msg_ref, root_ref, *, num_node_types):
    """Batched relation messages + per-node-type root linears for one row tile.

    x_ref:     (TILE_N, CP)      bf16 node features (channel-padded)
    wrel_ref:  (CP, E*CP)        bf16 all relation weights, one wide MXU operand
    wroot_ref: (CP, T*CP)        bf16 all root weights, one wide MXU operand
    b_ref:     (1, T*CP)         f32 root biases (padded lanes are zero)
    mask_ref:  (TILE_N, T)       f32 one-hot node-type mask
    msg_ref:   (TILE_N, E*CP)    bf16 out: per-edge-type messages W_e x
    root_ref:  (TILE_N, CP)      f32 out: selected root contribution
    """
    x = x_ref[...]

    # all E relation linears in a single 128*E-wide matmul
    msg = jnp.dot(x, wrel_ref[...], preferred_element_type=jnp.float32)
    msg_ref[...] = msg.astype(msg_ref.dtype)

    # all T root linears in a single 128*T-wide matmul, then one-hot selection
    root_all = jnp.dot(x, wroot_ref[...], preferred_element_type=jnp.float32)
    root_all = root_all + b_ref[...]
    acc = jnp.zeros(root_ref.shape, jnp.float32)
    for t in range(num_node_types):
        acc = acc + mask_ref[:, t:t + 1] * root_all[:, t * CP:(t + 1) * CP]
    root_ref[...] = acc


def agg_kernel(adj_ref, msg_ref, root_ref, o_ref, acc_ref, *, epilogue, cout):
    """One (row-tile, K-tile) step of the batched mean aggregation.

    out[i] = sum_{j,e} A_e[i, j] * msg_e[j]  + root[i]     (K = N*E flattened)
    Fused epilogue: ReLU (hidden layers) or masked log_softmax (last layer).
    """
    k = pl.program_id(1)

    @pl.when(k == 0)
    def _():
        acc_ref[...] = jnp.zeros_like(acc_ref)

    acc_ref[...] += jnp.dot(adj_ref[...], msg_ref[...],
                            preferred_element_type=jnp.float32)

    @pl.when(k == pl.num_programs(1) - 1)
    def _():
        acc = acc_ref[...] + root_ref[...]
        if epilogue == "relu":
            o_ref[...] = jnp.maximum(acc, 0.0).astype(o_ref.dtype)
        else:
            # fused log_softmax over the first `cout` (valid) lanes
            lane = jax.lax.broadcasted_iota(jnp.int32, acc.shape, 1)
            valid = lane < cout
            a = jnp.where(valid, acc, jnp.full_like(acc, -1e30))
            m = jnp.max(a, axis=-1, keepdims=True)
            s = a - m
            denom = jnp.sum(jnp.where(valid, jnp.exp(s), 0.0), axis=-1,
                            keepdims=True)
            lse = jnp.log(denom)
            o_ref[...] = jnp.where(valid, s - lse, 0.0).astype(o_ref.dtype)


# ----------------------------- kernel wrappers -----------------------------

def msg_root_layer(x, w_rel_all, w_root_all, b_flat, type_mask, num_node_types):
    n_pad, cin = x.shape
    ecp = w_rel_all.shape[1]
    tcp = w_root_all.shape[1]
    t = type_mask.shape[1]
    kernel = functools.partial(msg_root_kernel, num_node_types=num_node_types)
    return pl.pallas_call(
        kernel,
        out_shape=(jax.ShapeDtypeStruct((n_pad, ecp), jnp.bfloat16),
                   jax.ShapeDtypeStruct((n_pad, CP), jnp.float32)),
        grid=(n_pad // TILE_N,),
        in_specs=[
            pl.BlockSpec((TILE_N, cin), lambda i: (i, 0)),
            pl.BlockSpec((cin, ecp), lambda i: (0, 0)),
            pl.BlockSpec((cin, tcp), lambda i: (0, 0)),
            pl.BlockSpec((1, tcp), lambda i: (0, 0)),
            pl.BlockSpec((TILE_N, t), lambda i: (i, 0)),
        ],
        out_specs=[
            pl.BlockSpec((TILE_N, ecp), lambda i: (i, 0)),
            pl.BlockSpec((TILE_N, CP), lambda i: (i, 0)),
        ],
        compiler_params=pltpu.CompilerParams(
            dimension_semantics=("parallel",),
            vmem_limit_bytes=32 * 1024 * 1024),
    )(x, w_rel_all, w_root_all, b_flat, type_mask)


def agg_layer(adj_il, msg_flat, root, *, epilogue, cout, out_dtype):
    n_pad, k_total = adj_il.shape
    kernel = functools.partial(agg_kernel, epilogue=epilogue, cout=cout)
    return pl.pallas_call(
        kernel,
        out_shape=jax.ShapeDtypeStruct((n_pad, CP), out_dtype),
        grid=(n_pad // TILE_N, k_total // TILE_K),
        in_specs=[
            pl.BlockSpec((TILE_N, TILE_K), lambda i, k: (i, k)),
            pl.BlockSpec((TILE_K, CP), lambda i, k: (k, 0)),
            pl.BlockSpec((TILE_N, CP), lambda i, k: (i, 0)),
        ],
        out_specs=pl.BlockSpec((TILE_N, CP), lambda i, k: (i, 0)),
        scratch_shapes=[pltpu.VMEM((TILE_N, CP), jnp.float32)],
        compiler_params=pltpu.CompilerParams(
            dimension_semantics=("parallel", "arbitrary"),
            vmem_limit_bytes=32 * 1024 * 1024),
    )(adj_il, msg_flat, root)


# ----------------------------- plain-JAX glue -----------------------------

def build_adjacency_interleaved(edge_index, edge_type, num_edge_types, n_pad):
    """Mean-normalized dense adjacency, interleaved so that column j*E + e is
    A_e[:, j] -- matches msg_flat row index node*E + e for one long-K matmul."""
    # TODO(synk): for real MAG/ClusterGCN partitions this dense O(E*N^2) adjacency
    # should become a CSR/gather formulation with scalar-prefetched neighbor lists.
    src, tgt = edge_index[0], edge_index[1]
    adj = jnp.zeros((num_edge_types, n_pad, n_pad), jnp.float32)
    adj = adj.at[edge_type, tgt, src].add(1.0)
    deg = jnp.sum(adj, axis=2, keepdims=True)
    adj = adj / jnp.maximum(deg, 1.0)
    adj_il = jnp.transpose(adj, (1, 2, 0)).reshape(n_pad, n_pad * num_edge_types)
    return adj_il.astype(jnp.bfloat16)


def group_input(x_dict, emb_dict, node_type, local_node_idx, in_ch, n_pad):
    """RGCN.group_input: per-type gather of raw features / learned embeddings,
    channel-padded to CP lanes and cast to bf16 for the MXU."""
    h = jnp.zeros((n_pad, in_ch), jnp.float32)
    for key, x in {**x_dict, **emb_dict}.items():
        mask = (node_type == key)[:, None]
        idx = jnp.clip(local_node_idx, 0, x.shape[0] - 1)
        h = jnp.where(mask, x[idx], h)
    h = jnp.pad(h, ((0, 0), (0, CP - in_ch)))
    return h.astype(jnp.bfloat16)


def prepare_params(raw_params):
    """Pad channels to CP and batch relation / root weights into wide MXU operands."""
    prepared = []
    for w_rel, w_root, b_root in raw_params:
        num_e, cin, cout = w_rel.shape
        num_t = w_root.shape[0]
        wr = jnp.zeros((num_e, CP, CP), jnp.float32).at[:, :cin, :cout].set(w_rel)
        wr = jnp.transpose(wr, (1, 0, 2)).reshape(CP, num_e * CP).astype(jnp.bfloat16)
        wt = jnp.zeros((num_t, CP, CP), jnp.float32).at[:, :cin, :cout].set(w_root)
        wt = jnp.transpose(wt, (1, 0, 2)).reshape(CP, num_t * CP).astype(jnp.bfloat16)
        bb = jnp.zeros((num_t, CP), jnp.float32).at[:, :cout].set(b_root)
        bb = bb.reshape(1, num_t * CP)
        prepared.append((wr, wt, bb))
    return prepared


def rgcn_forward(prepared, x0, adj_il, type_mask, out_ch, n_nodes,
                 num_node_types):
    x = x0
    num_layers = len(prepared)
    out = None
    for li, (wr, wt, bb) in enumerate(prepared):
        last = li == num_layers - 1
        msg, root = msg_root_layer(x, wr, wt, bb, type_mask, num_node_types)
        msg_flat = msg.reshape(-1, CP)   # (n_pad*E, CP): row index = node*E + e
        out = agg_layer(adj_il, msg_flat, root,
                        epilogue="logsoftmax" if last else "relu",
                        cout=out_ch if last else CP,
                        out_dtype=jnp.float32 if last else jnp.bfloat16)
        # TODO(synk): F.dropout with training=True needs in-kernel PRNG
        # (pltpu.prng_random_bits); inference mode => identity here.
        x = out
    return out[:n_nodes, :out_ch]


def reference_forward(prepared, x0, adj_il, type_mask, out_ch, n_nodes,
                      num_node_types):
    """Pure-JAX reference using the same bf16 operands / layouts as the kernels."""
    x = x0
    num_layers = len(prepared)
    out = None
    for li, (wr, wt, bb) in enumerate(prepared):
        msg = jnp.dot(x, wr, preferred_element_type=jnp.float32).astype(jnp.bfloat16)
        msg_flat = msg.reshape(-1, CP)
        agg = jnp.dot(adj_il, msg_flat, preferred_element_type=jnp.float32)
        root_all = jnp.dot(x, wt, preferred_element_type=jnp.float32) + bb
        root = jnp.zeros_like(agg)
        for t in range(num_node_types):
            root = root + type_mask[:, t:t + 1] * root_all[:, t * CP:(t + 1) * CP]
        out = agg + root
        if li != num_layers - 1:
            x = jnp.maximum(out, 0.0).astype(jnp.bfloat16)
    logits = out[:n_nodes, :out_ch]
    return jax.nn.log_softmax(logits, axis=-1)


# ----------------------------- parameter setup -----------------------------

def init_params(key, in_ch, hid_ch, out_ch, num_layers, num_node_types,
                num_edge_types):
    dims = [in_ch] + [hid_ch] * (num_layers - 1) + [out_ch]
    params = []
    for layer in range(num_layers):
        cin, cout = dims[layer], dims[layer + 1]
        key, k1, k2, k3 = jax.random.split(key, 4)
        scale = 1.0 / jnp.sqrt(jnp.float32(cin))
        # stored pre-transposed: (Cin, Cout) so kernels compute x @ W
        w_rel = jax.random.uniform(k1, (num_edge_types, cin, cout),
                                   jnp.float32, -scale, scale)
        w_root = jax.random.uniform(k2, (num_node_types, cin, cout),
                                    jnp.float32, -scale, scale)
        b_root = jax.random.uniform(k3, (num_node_types, cout),
                                    jnp.float32, -scale, scale)
        params.append((w_rel, w_root, b_root))
    return key, params


# ----------------------------- main -----------------------------

if __name__ == "__main__":
    in_ch, hid_ch, out_ch = 32, 32, 16
    num_layers = 3
    num_edge_types = 4
    num_node_types = 3
    num_nodes_dict = {0: 80, 1: 70, 2: 60}   # type 0 has raw features; 1, 2 use embeddings
    n_nodes = 200
    n_edges = 512

    n_pad = _round_up(n_nodes, TILE_N)

    key = jax.random.PRNGKey(0)
    key, params = init_params(key, in_ch, hid_ch, out_ch, num_layers,
                              num_node_types, num_edge_types)
    prepared = prepare_params(params)

    key, kx, k1, k2, ke, kt = jax.random.split(key, 6)
    x_dict = {0: jax.random.normal(kx, (num_nodes_dict[0], in_ch), jnp.float32)}
    emb_dict = {1: jax.random.normal(k1, (num_nodes_dict[1], in_ch), jnp.float32),
                2: jax.random.normal(k2, (num_nodes_dict[2], in_ch), jnp.float32)}

    # node typing: 80 / 70 / 50 nodes of types 0/1/2; padded rows get type -1
    counts = [80, 70, 50]
    node_type = jnp.concatenate(
        [jnp.full((c,), t, jnp.int32) for t, c in enumerate(counts)])
    local_node_idx = jnp.concatenate(
        [jnp.arange(c, dtype=jnp.int32) for c in counts])
    node_type = jnp.pad(node_type, (0, n_pad - n_nodes), constant_values=-1)
    local_node_idx = jnp.pad(local_node_idx, (0, n_pad - n_nodes))

    edge_index = jax.random.randint(ke, (2, n_edges), 0, n_nodes, jnp.int32)
    edge_type = jax.random.randint(kt, (n_edges,), 0, num_edge_types, jnp.int32)

    x0 = group_input(x_dict, emb_dict, node_type, local_node_idx, in_ch, n_pad)
    adj_il = build_adjacency_interleaved(edge_index, edge_type,
                                         num_edge_types, n_pad)
    type_mask = jax.nn.one_hot(node_type, num_node_types, dtype=jnp.float32)

    out = rgcn_forward(prepared, x0, adj_il, type_mask, out_ch, n_nodes,
                       num_node_types)
    out = jax.block_until_ready(out)
    ref = reference_forward(prepared, x0, adj_il, type_mask, out_ch, n_nodes,
                            num_node_types)
    ref = jax.block_until_ready(ref)

    assert out.shape == (n_nodes, out_ch)
    assert bool(jnp.all(jnp.isfinite(out)))
    # log_softmax rows must normalize to ~1 in probability space
    assert bool(jnp.allclose(jnp.sum(jnp.exp(out), axis=-1), 1.0, atol=1e-3))
    # match the pure-JAX reference built on identical bf16 operands
    assert bool(jnp.allclose(out, ref, atol=1e-2, rtol=1e-2)), \
        float(jnp.max(jnp.abs(out - ref)))
    print("KERNEL_OK")
</pallas_src>

<mosaic_0001>
module attributes {stable_mosaic.version = 11 : i64} {
  func.func @msg_root_kernel(%arg0: i32, %arg1: memref<128x128xbf16, #tpu.memory_space<vmem>>, %arg2: memref<128x512xbf16, #tpu.memory_space<vmem>>, %arg3: memref<128x384xbf16, #tpu.memory_space<vmem>>, %arg4: memref<1x384xf32, #tpu.memory_space<vmem>>, %arg5: memref<128x3xf32, #tpu.memory_space<vmem>>, %arg6: memref<128x512xbf16, #tpu.memory_space<vmem>>, %arg7: memref<128x128xf32, #tpu.memory_space<vmem>>) attributes {dimension_semantics = [#tpu.dimension_semantics<parallel>], iteration_bounds = array<i64: 2>, scalar_prefetch = 0 : i64, scratch_operands = 0 : i64, tpu.core_type = #tpu.core_type<tc>, window_params = [{transform_indices = @transform_0, window_bounds = array<i64: 128, 128>}, {pipeline_mode = #tpu.pipeline_mode<synchronous>, transform_indices = @transform_1, window_bounds = array<i64: 128, 512>}, {pipeline_mode = #tpu.pipeline_mode<synchronous>, transform_indices = @transform_2, window_bounds = array<i64: 128, 384>}, {pipeline_mode = #tpu.pipeline_mode<synchronous>, transform_indices = @transform_3, window_bounds = array<i64: 1, 384>}, {transform_indices = @transform_4, window_bounds = array<i64: 128, 3>}, {transform_indices = @transform_5, window_bounds = array<i64: 128, 512>}, {transform_indices = @transform_6, window_bounds = array<i64: 128, 128>}]} {
    %c0 = arith.constant 0 : index
    %c0_0 = arith.constant 0 : index
    %0 = vector.load %arg1[%c0, %c0_0] : memref<128x128xbf16, #tpu.memory_space<vmem>>, vector<128x128xbf16>
    %c0_1 = arith.constant 0 : index
    %c0_2 = arith.constant 0 : index
    %1 = vector.load %arg2[%c0_1, %c0_2] : memref<128x512xbf16, #tpu.memory_space<vmem>>, vector<128x512xbf16>
    %cst = arith.constant dense<0.000000e+00> : vector<128x512xf32>
    %2 = tpu.matmul %0, %1, %cst {dimension_numbers = #tpu.dot_dimension_numbers<[1], [0], [0], [1], [0, 0, 1, 1], [], []>} : vector<128x128xbf16>, vector<128x512xbf16>, vector<128x512xf32> -> vector<128x512xf32>
    %3 = arith.truncf %2 : vector<128x512xf32> to vector<128x512xbf16>
    %c0_3 = arith.constant 0 : index
    %c0_4 = arith.constant 0 : index
    %4 = vector.load %arg6[%c0_3, %c0_4] : memref<128x512xbf16, #tpu.memory_space<vmem>>, vector<128x512xbf16>
    tpu.vector_store %arg6[%c0_3, %c0_4], %3 {strides = array<i32>} : memref<128x512xbf16, #tpu.memory_space<vmem>>, vector<128x512xbf16>,
    %c0_5 = arith.constant 0 : index
    %c0_6 = arith.constant 0 : index
    %5 = vector.load %arg3[%c0_5, %c0_6] : memref<128x384xbf16, #tpu.memory_space<vmem>>, vector<128x384xbf16>
    %cst_7 = arith.constant dense<0.000000e+00> : vector<128x384xf32>
    %6 = tpu.matmul %0, %5, %cst_7 {dimension_numbers = #tpu.dot_dimension_numbers<[1], [0], [0], [1], [0, 0, 1, 1], [], []>} : vector<128x128xbf16>, vector<128x384xbf16>, vector<128x384xf32> -> vector<128x384xf32>
    %c0_8 = arith.constant 0 : index
    %c0_9 = arith.constant 0 : index
    %7 = vector.load %arg4[%c0_8, %c0_9] : memref<1x384xf32, #tpu.memory_space<vmem>>, vector<1x384xf32>
    %8 = vector.broadcast %7 : vector<1x384xf32> to vector<128x384xf32>
    %9 = arith.addf %6, %8 : vector<128x384xf32>
    %cst_10 = arith.constant 0.000000e+00 : f32
    %10 = vector.broadcast %cst_10 : f32 to vector<128x128xf32>
    %c0_11 = arith.constant 0 : index
    %c0_12 = arith.constant 0 : index
    %11 = vector.load %arg5[%c0_11, %c0_12] : memref<128x3xf32, #tpu.memory_space<vmem>>, vector<128x1xf32>
    %12 = vector.extract_strided_slice %9 {offsets = [0, 0], sizes = [128, 128], strides = [1, 1]} : vector<128x384xf32> to vector<128x128xf32>
    %13 = vector.broadcast %11 : vector<128x1xf32> to vector<128x128xf32>
    %14 = arith.mulf %13, %12 : vector<128x128xf32>
    %15 = arith.addf %10, %14 : vector<128x128xf32>
    %c0_13 = arith.constant 0 : index
    %c1 = arith.constant 1 : index
    %16 = vector.load %arg5[%c0_13, %c1] : memref<128x3xf32, #tpu.memory_space<vmem>>, vector<128x1xf32>
    %17 = vector.extract_strided_slice %9 {offsets = [0, 128], sizes = [128, 128], strides = [1, 1]} : vector<128x384xf32> to vector<128x128xf32>
    %18 = vector.broadcast %16 : vector<128x1xf32> to vector<128x128xf32>
    %19 = arith.mulf %18, %17 : vector<128x128xf32>
    %20 = arith.addf %15, %19 : vector<128x128xf32>
    %c0_14 = arith.constant 0 : index
    %c2 = arith.constant 2 : index
    %21 = vector.load %arg5[%c0_14, %c2] : memref<128x3xf32, #tpu.memory_space<vmem>>, vector<128x1xf32>
    %22 = vector.extract_strided_slice %9 {offsets = [0, 256], sizes = [128, 128], strides = [1, 1]} : vector<128x384xf32> to vector<128x128xf32>
    %23 = vector.broadcast %21 : vector<128x1xf32> to vector<128x128xf32>
    %24 = arith.mulf %23, %22 : vector<128x128xf32>
    %25 = arith.addf %20, %24 : vector<128x128xf32>
    %c0_15 = arith.constant 0 : index
    %c0_16 = arith.constant 0 : index
    %26 = vector.load %arg7[%c0_15, %c0_16] : memref<128x128xf32, #tpu.memory_space<vmem>>, vector<128x128xf32>
    tpu.vector_store %arg7[%c0_15, %c0_16], %25 {strides = array<i32>} : memref<128x128xf32, #tpu.memory_space<vmem>>, vector<128x128xf32>,
    return
  }
  func.func @transform_0(%arg0: i32) -> (i32, i32) {
    %c0_i32 = arith.constant 0 : i32
    %c0_i32_0 = arith.constant 0 : i32
    return %arg0, %c0_i32 : i32, i32
  }
  func.func @transform_1(%arg0: i32) -> (i32, i32) {
    %c0_i32 = arith.constant 0 : i32
    %c0_i32_0 = arith.constant 0 : i32
    %c0_i32_1 = arith.constant 0 : i32
    return %c0_i32, %c0_i32_0 : i32, i32
  }
  func.func @transform_2(%arg0: i32) -> (i32, i32) {
    %c0_i32 = arith.constant 0 : i32
    %c0_i32_0 = arith.constant 0 : i32
    %c0_i32_1 = arith.constant 0 : i32
    return %c0_i32, %c0_i32_0 : i32, i32
  }
  func.func @transform_3(%arg0: i32) -> (i32, i32) {
    %c0_i32 = arith.constant 0 : i32
    %c0_i32_0 = arith.constant 0 : i32
    %c0_i32_1 = arith.constant 0 : i32
    return %c0_i32, %c0_i32_0 : i32, i32
  }
  func.func @transform_4(%arg0: i32) -> (i32, i32) {
    %c0_i32 = arith.constant 0 : i32
    %c0_i32_0 = arith.constant 0 : i32
    return %arg0, %c0_i32 : i32, i32
  }
  func.func @transform_5(%arg0: i32) -> (i32, i32) {
    %c0_i32 = arith.constant 0 : i32
    %c0_i32_0 = arith.constant 0 : i32
    return %arg0, %c0_i32 : i32, i32
  }
  func.func @transform_6(%arg0: i32) -> (i32, i32) {
    %c0_i32 = arith.constant 0 : i32
    %c0_i32_0 = arith.constant 0 : i32
    return %arg0, %c0_i32 : i32, i32
  }
}

</mosaic_0001>

<llo_original>
// kernel: tpu_custom_call.1
$region0: #{tpu_custom_call.1}
  #allocation0 [shape = 'u32[]', space=smem, size = 0x4, offset = 0x4, fixed_abs, tag = 'smem constant byte address 0x4 - core index']
  #allocation1 [shape = 'u32[144,128]{1,0:T(1,128)}', space=vmem, size = 0x12000, scoped, tag = 'internal scratch']
  %s0 = inlined_call_operand.hbm [shape: bf16[256,128], index: 0, kind: input, shape index: {}]
  %s1 = inlined_call_operand.vmem [shape: bf16[128,512], index: 1, kind: input, shape index: {}]
  %s2 = inlined_call_operand.hbm [shape: bf16[128,384], index: 2, kind: input, shape index: {}]
  %s3 = inlined_call_operand.vmem [shape: f32[1,384], index: 3, kind: input, shape index: {}]
  %s4 = inlined_call_operand.vmem [shape: f32[256,3], index: 4, kind: input, shape index: {}]
  %s5 = inlined_call_operand.hbm [shape: bf16[256,512], index: 5, kind: output, shape index: {0}]
  %s6 = inlined_call_operand.hbm [shape: f32[256,128], index: 6, kind: output, shape index: {1}]
  %7 = xla_tuple %s5, %s6
  %s8 = sld [smem:[#allocation0]]
  $region69: #{tpu_custom_call.1} parent=0
    _
  %s10 = ssub.s32 1, %s8
  %s11 = scalar_select 0, %s10, %s8
  $region1: #{tpu_custom_call.1} parent=0
    #allocation2 [shape = 'u8[65536]{0}', space=vmem, size = 0x10000, scoped, tag = 'input window, operand 0']
    #allocation3 [shape = 's32[2]{0}', space=sflag, size = 0x8, scoped, tag = 'scoped memory for tpu_custom_call.1']
    #allocation4 [shape = 's32[2]{0}', space=sflag, size = 0x8, scoped, tag = 'scoped memory for tpu_custom_call.1']
    #allocation5 [shape = 'u8[98304]{0}', space=vmem, size = 0x18000, scoped, tag = 'input window, operand 2, single buffered']
    #allocation6 [shape = 's32[1]{0}', space=sflag, size = 0x4, scoped, tag = 'scoped memory for tpu_custom_call.1']
    #allocation7 [shape = 'u8[262144]{0}', space=vmem, size = 0x40000, scoped, tag = 'output window, operand 0']
    #allocation8 [shape = 'u8[131072]{0}', space=vmem, size = 0x20000, scoped, tag = 'output window, operand 1']
    #allocation9 [shape = 's32[2]{0}', space=sflag, size = 0x8, scoped, tag = 'scoped memory for tpu_custom_call.1']
    %12 = vsyncpa [#allocation3], 0
    %s13 = scalar_lea.sflag [#allocation3], 1
    %14 = vsyncpa %s13, 0
    %15 = vsyncpa [#allocation6], 0
    %16 = vsyncpa [#allocation4], 0
    %s17 = scalar_lea.sflag [#allocation4], 1
    %18 = vsyncpa %s17, 0
    %19 = vsyncpa [#allocation9], 0
    %s20 = scalar_lea.sflag [#allocation9], 1
    %21 = vsyncpa %s20, 0
    loop: start=0, step=1, limit=4
    $region2: #{tpu_custom_call.1} parent=1 // loop_pre_header
      _
    $region3: #{tpu_custom_call.1} parent=1 // loop_header
      %s23 = sphi 0, %s27
      %p24 = scmp.ge.s32.totalorder %s23, 4
      %s33 = sphi 0, %s35
      %s36 = sphi 0, %s33
      %s37 = sphi 0, %s36
      %s53 = sphi 0, %s37
      %s57 = sphi 0, %s57
      %s59 = sphi 0, %s57
      %s60 = sphi 0, %s59
      %s74 = sphi 0, %s60
      %s78 = sphi 0, %s78
      %s80 = sphi 0, %s78
      %s81 = sphi 0, %s80
      %s95 = sphi 0, %s81
      %s99 = sphi 0, %s99
      %s101 = sphi 0, %s99
      %s102 = sphi 0, %s101
      %s116 = sphi 0, %s102
      %s122 = sphi 0, %s124
      %s125 = sphi 0, %s122
      %s126 = sphi 0, %s125
      %s142 = sphi 0, %s126
      %s148 = sphi 0, %s150
      %s151 = sphi 0, %s148
      %s152 = sphi 0, %s151
      %s168 = sphi 0, %s152
      %s174 = sphi 0, %s176
      %s177 = sphi 0, %s174
      %s178 = sphi 0, %s177
      %s194 = sphi 0, %s178
    $region4: #{tpu_custom_call.1} parent=1 // loop_header_branch
      %26 = sbr.rel (%p24) target = $region8
    $region5: #{tpu_custom_call.1} parent=1 // loop_body
      %s28 = ssub.s32 %s23, 1
      %s29 = ssub.s32 %s23, 2
      %s30 = sadd.s32 %s23, 1
      %s31 = ssub.s32 %s23, %s30
      %p32 = scmp.eq.s32.totalorder %s31, 0
      %s34 = sadd.s32 %s33, 1
      %s35 = scalar_select %p32, %s33, %s34
      %p38 = pneg %p32
      %p39 = scmp.eq.s32.totalorder %s23, 1
      %p40 = por %p38, %p39
      %p41 = scmp.ne.s32.totalorder %s33, %s36
      %p42 = scmp.eq.s32.totalorder %s23, 0
      %p43 = por %p41, %p42
      %p44 = scmp.ne.s32.totalorder %s33, %s36
      %p45 = scmp.eq.s32.totalorder %s28, 1
      %p46 = por %p44, %p45
      %p47 = scmp.ne.s32.totalorder %s36, %s37
      %p48 = scmp.eq.s32.totalorder %s28, 0
      %p49 = por %p47, %p48
      %p50 = scmp.ne.s32.totalorder %s36, %s37
      %p51 = scmp.eq.s32.totalorder %s29, 1
      %p52 = por %p50, %p51
      %p54 = scmp.ne.s32.totalorder %s37, %s53
      %p55 = scmp.eq.s32.totalorder %s29, 0
      %p56 = por %p54, %p55
      %s58 = sadd.s32 %s57, 1
      %p61 = scmp.eq.s32.totalorder %s23, 1
      %p62 = scmp.ne.s32.totalorder %s57, %s59
      %p63 = scmp.eq.s32.totalorder %s23, 0
      %p64 = por %p62, %p63
      %p65 = scmp.ne.s32.totalorder %s57, %s59
      %p66 = scmp.eq.s32.totalorder %s28, 1
      %p67 = por %p65, %p66
      %p68 = scmp.ne.s32.totalorder %s59, %s60
      %p69 = scmp.eq.s32.totalorder %s28, 0
      %p70 = por %p68, %p69
      %p71 = scmp.ne.s32.totalorder %s59, %s60
      %p72 = scmp.eq.s32.totalorder %s29, 1
      %p73 = por %p71, %p72
      %p75 = scmp.ne.s32.totalorder %s60, %s74
      %p76 = scmp.eq.s32.totalorder %s29, 0
      %p77 = por %p75, %p76
      %s79 = sadd.s32 %s78, 1
      %p82 = scmp.eq.s32.totalorder %s23, 1
      %p83 = scmp.ne.s32.totalorder %s78, %s80
      %p84 = scmp.eq.s32.totalorder %s23, 0
      %p85 = por %p83, %p84
      %p86 = scmp.ne.s32.totalorder %s78, %s80
      %p87 = scmp.eq.s32.totalorder %s28, 1
      %p88 = por %p86, %p87
      %p89 = scmp.ne.s32.totalorder %s80, %s81
      %p90 = scmp.eq.s32.totalorder %s28, 0
      %p91 = por %p89, %p90
      %p92 = scmp.ne.s32.totalorder %s80, %s81
      %p93 = scmp.eq.s32.totalorder %s29, 1
      %p94 = por %p92, %p93
      %p96 = scmp.ne.s32.totalorder %s81, %s95
      %p97 = scmp.eq.s32.totalorder %s29, 0
      %p98 = por %p96, %p97
      %s100 = sadd.s32 %s99, 1
      %p103 = scmp.eq.s32.totalorder %s23, 1
      %p104 = scmp.ne.s32.totalorder %s99, %s101
      %p105 = scmp.eq.s32.totalorder %s23, 0
      %p106 = por %p104, %p105
      %p107 = scmp.ne.s32.totalorder %s99, %s101
      %p108 = scmp.eq.s32.totalorder %s28, 1
      %p109 = por %p107, %p108
      %p110 = scmp.ne.s32.totalorder %s101, %s102
      %p111 = scmp.eq.s32.totalorder %s28, 0
      %p112 = por %p110, %p111
      %p113 = scmp.ne.s32.totalorder %s101, %s102
      %p114 = scmp.eq.s32.totalorder %s29, 1
      %p115 = por %p113, %p114
      %p117 = scmp.ne.s32.totalorder %s102, %s116
      %p118 = scmp.eq.s32.totalorder %s29, 0
      %p119 = por %p117, %p118
      %s120 = ssub.s32 %s23, %s30
      %p121 = scmp.eq.s32.totalorder %s120, 0
      %s123 = sadd.s32 %s122, 1
      %s124 = scalar_select %p121, %s122, %s123
      %p127 = pneg %p121
      %p128 = scmp.eq.s32.totalorder %s23, 1
      %p129 = por %p127, %p128
      %p130 = scmp.ne.s32.totalorder %s122, %s125
      %p131 = scmp.eq.s32.totalorder %s23, 0
      %p132 = por %p130, %p131
      %p133 = scmp.ne.s32.totalorder %s122, %s125
      %p134 = scmp.eq.s32.totalorder %s28, 1
      %p135 = por %p133, %p134
      %p136 = scmp.ne.s32.totalorder %s125, %s126
      %p137 = scmp.eq.s32.totalorder %s28, 0
      %p138 = por %p136, %p137
      %p139 = scmp.ne.s32.totalorder %s125, %s126
      %p140 = scmp.eq.s32.totalorder %s29, 1
      %p141 = por %p139, %p140
      %p143 = scmp.ne.s32.totalorder %s126, %s142
      %p144 = scmp.eq.s32.totalorder %s29, 0
      %p145 = por %p143, %p144
      %s146 = ssub.s32 %s23, %s30
      %p147 = scmp.eq.s32.totalorder %s146, 0
      %s149 = sadd.s32 %s148, 1
      %s150 = scalar_select %p147, %s148, %s149
      %p153 = pneg %p147
      %p154 = scmp.eq.s32.totalorder %s23, 1
      %p155 = por %p153, %p154
      %p156 = scmp.ne.s32.totalorder %s148, %s151
      %p157 = scmp.eq.s32.totalorder %s23, 0
      %p158 = por %p156, %p157
      %p159 = scmp.ne.s32.totalorder %s148, %s151
      %p160 = scmp.eq.s32.totalorder %s28, 1
      %p161 = por %p159, %p160
      %p162 = scmp.ne.s32.totalorder %s151, %s152
      %p163 = scmp.eq.s32.totalorder %s28, 0
      %p164 = por %p162, %p163
      %p165 = scmp.ne.s32.totalorder %s151, %s152
      %p166 = scmp.eq.s32.totalorder %s29, 1
      %p167 = por %p165, %p166
      %p169 = scmp.ne.s32.totalorder %s152, %s168
      %p170 = scmp.eq.s32.totalorder %s29, 0
      %p171 = por %p169, %p170
      %s172 = ssub.s32 %s23, %s30
      %p173 = scmp.eq.s32.totalorder %s172, 0
      %s175 = sadd.s32 %s174, 1
      %s176 = scalar_select %p173, %s174, %s175
      %p179 = pneg %p173
      %p180 = scmp.eq.s32.totalorder %s23, 1
      %p181 = por %p179, %p180
      %p182 = scmp.ne.s32.totalorder %s174, %s177
      %p183 = scmp.eq.s32.totalorder %s23, 0
      %p184 = por %p182, %p183
      %p185 = scmp.ne.s32.totalorder %s174, %s177
      %p186 = scmp.eq.s32.totalorder %s28, 1
      %p187 = por %p185, %p186
      %p188 = scmp.ne.s32.totalorder %s177, %s178
      %p189 = scmp.eq.s32.totalorder %s28, 0
      %p190 = por %p188, %p189
      %p191 = scmp.ne.s32.totalorder %s177, %s178
      %p192 = scmp.eq.s32.totalorder %s29, 1
      %p193 = por %p191, %p192
      %p195 = scmp.ne.s32.totalorder %s178, %s194
      %p196 = scmp.eq.s32.totalorder %s29, 0
      %p197 = por %p195, %p196
      %p198 = scmp.le.s32.totalorder 1, %s23
      %p199 = scmp.lt.s32.totalorder %s23, 3
      %p200 = pnand %p198, %p199
      %p201 = pneg %p200
      // Predicated region
      $region9: #{tpu_custom_call.1} parent=5 // pred_check
        _
      $region10: #{tpu_custom_call.1} parent=5 // pred_check_branch
        %203 = sbr.rel (%p200) target = $region12
      $region11: #{tpu_custom_call.1} parent=5 // pred_region
        %s204 = ssub.s32 %s23, 1
        // Predicated region
        $region13: #{tpu_custom_call.1} parent=11 // pred_check
          %p205 = pneg %p70
        $region14: #{tpu_custom_call.1} parent=11 // pred_check_branch
          %207 = sbr.rel (%p205) target = $region16
        $region15: #{tpu_custom_call.1} parent=11 // pred_region
          _
        $region16: #{tpu_custom_call.1} parent=11 // pred_fallthru
          _
        // Predicated region
        $region17: #{tpu_custom_call.1} parent=11 // pred_check
          %p208 = pneg %p91
        $region18: #{tpu_custom_call.1} parent=11 // pred_check_branch
          %210 = sbr.rel (%p208) target = $region20
        $region19: #{tpu_custom_call.1} parent=11 // pred_region
          %s212 = ssub.s32 3072, 3072
          %213 = vsyncadd [#allocation6], %s212
          %s214 = sshll.u32 [#allocation5], 4
          %s215 = int_to_ptr.vmem [resolvable:$true] %s214
          %220 = dma.hbm_to_vmem [thread:$0]  %s2, 3072, %s215, [#allocation6], 192, 192, 12
        $region20: #{tpu_custom_call.1} parent=11 // pred_fallthru
          _
        // Predicated region
        $region21: #{tpu_custom_call.1} parent=11 // pred_check
          %p221 = pneg %p112
        $region22: #{tpu_custom_call.1} parent=11 // pred_check_branch
          %223 = sbr.rel (%p221) target = $region24
        $region23: #{tpu_custom_call.1} parent=11 // pred_region
          _
        $region24: #{tpu_custom_call.1} parent=11 // pred_fallthru
          _
      $region12: #{tpu_custom_call.1} parent=5 // pred_fallthru
        _
      %p224 = scmp.lt.s32.totalorder %s23, 2
      // Predicated region
      $region25: #{tpu_custom_call.1} parent=5 // pred_check
        %p225 = pneg %p224
      $region26: #{tpu_custom_call.1} parent=5 // pred_check_branch
        %227 = sbr.rel (%p225) target = $region28
      $region27: #{tpu_custom_call.1} parent=5 // pred_region
        // Predicated region
        $region29: #{tpu_custom_call.1} parent=27 // pred_check
          %p228 = pneg %p43
        $region30: #{tpu_custom_call.1} parent=27 // pred_check_branch
          %230 = sbr.rel (%p228) target = $region32
        $region31: #{tpu_custom_call.1} parent=27 // pred_region
          %s231 = sand.u32 %s33, 1
          %s232 = scalar_lea.sflag [#allocation3], %s231
          %s233 = sand.u32 %s33, 1
          %s234 = smul.addr %s233, 64
          %s235 = scalar_lea.vmem [#allocation2], %s234
          %s236 = smul.u32 16, %s23
          %s238 = ssub.s32 1024, 1024
          %239 = vsyncadd %s232, %s238
          %s240 = smul.addr %s236, 64
          %s241 = scalar_lea.hbm %s0, %s240
          %s242 = sshll.u32 %s235, 4
          %s243 = int_to_ptr.vmem [resolvable:$true] %s242
          %248 = dma.hbm_to_vmem [thread:$0]  %s241, 1024, %s243, %s232, 64, 64, 4
        $region32: #{tpu_custom_call.1} parent=27 // pred_fallthru
          _
        // Predicated region
        $region33: #{tpu_custom_call.1} parent=27 // pred_check
          %p249 = pneg %p132
        $region34: #{tpu_custom_call.1} parent=27 // pred_check_branch
          %251 = sbr.rel (%p249) target = $region36
        $region35: #{tpu_custom_call.1} parent=27 // pred_region
          %s252 = smul.u32 16, %s23
          %p253 = scmp.lt.s32.totalorder %s252, 31
          %s254 = scalar_select %p253, %s252, 31
          %s255 = smul.addr %s254, 8
          %s256 = scalar_lea.vmem %s4, %s255
          %s257 = smul.u32 16, %s23
        $region36: #{tpu_custom_call.1} parent=27 // pred_fallthru
          _
      $region28: #{tpu_custom_call.1} parent=5 // pred_fallthru
        _
      %p258 = scmp.le.s32.totalorder 1, %s23
      %p259 = scmp.lt.s32.totalorder %s23, 3
      %p260 = pnand %p258, %p259
      %p261 = pneg %p260
      // Predicated region
      $region37: #{tpu_custom_call.1} parent=5 // pred_check
        _
      $region38: #{tpu_custom_call.1} parent=5 // pred_check_branch
        %263 = sbr.rel (%p260) target = $region40
      $region39: #{tpu_custom_call.1} parent=5 // pred_region
        %s264 = ssub.s32 %s23, 1
        %s265 = sand.u32 %s36, 1
        %s266 = scalar_lea.sflag [#allocation3], %s265
        %s267 = sand.u32 %s36, 1
        %s268 = smul.addr %s267, 64
        %s269 = scalar_lea.vmem [#allocation2], %s268
        // Predicated region
        $region41: #{tpu_custom_call.1} parent=39 // pred_check
          %p270 = pneg %p49
        $region42: #{tpu_custom_call.1} parent=39 // pred_check_branch
          %272 = sbr.rel (%p270) target = $region44
        $region43: #{tpu_custom_call.1} parent=39 // pred_region
          %273 = dma.done %s266, 1024
        $region44: #{tpu_custom_call.1} parent=39 // pred_fallthru
          _
        // Predicated region
        $region45: #{tpu_custom_call.1} parent=39 // pred_check
          %p274 = pneg %p91
        $region46: #{tpu_custom_call.1} parent=39 // pred_check_branch
          %276 = sbr.rel (%p274) target = $region48
        $region47: #{tpu_custom_call.1} parent=39 // pred_region
          %277 = dma.done [#allocation6], 3072
        $region48: #{tpu_custom_call.1} parent=39 // pred_fallthru
          _
        %s278 = sand.u32 %s36, 1
        %s279 = scalar_lea.sflag [#allocation3], %s278
        %s280 = sand.u32 %s36, 1
        %s281 = smul.addr %s280, 64
        %s282 = scalar_lea.vmem [#allocation2], %s281
        %p283 = pneg %p49
        %p284 = pneg %p46
        %p285 = pneg %p70
        %p286 = pneg %p67
        %p287 = pneg %p91
        %p288 = pneg %p88
        %p289 = pneg %p112
        %p290 = pneg %p109
        %s291 = smul.u32 16, %s28
        %p292 = scmp.lt.s32.totalorder %s291, 31
        %s293 = scalar_select %p292, %s291, 31
        %s294 = smul.addr %s293, 8
        %s295 = scalar_lea.vmem %s4, %s294
        %p296 = pneg %p138
        %p297 = pneg %p135
        %p298 = pneg %p164
        %p299 = pneg %p161
        %s300 = sand.u32 %s151, 1
        %s301 = scalar_lea.sflag [#allocation4], %s300
        %s302 = sand.u32 %s151, 1
        %s303 = smul.addr %s302, 256
        %s304 = scalar_lea.vmem [#allocation7], %s303
        %p305 = pneg %p190
        %p306 = pneg %p187
        %s307 = sand.u32 %s177, 1
        %s308 = scalar_lea.sflag [#allocation9], %s307
        %s309 = sand.u32 %s177, 1
        %s310 = smul.addr %s309, 128
        %s311 = scalar_lea.vmem [#allocation8], %s310
        %s312 = smul.u32 16, %s28
        %s313 = smul.u32 16, %s28
        %p314 = scmp.lt.s32.totalorder %s313, 31
        %s315 = scalar_select %p314, %s313, 31
        %s316 = smul.addr %s315, 8
        %s317 = scalar_lea.vmem %s4, %s316
        %s318 = smul.u32 16, %s28
        %s319 = smul.u32 16, %s28
        %s320 = smul.u32 16, %s28
        %v322 = vld [vmem:[%s269] sm:$0xf]
        %v323 = vld [vmem:[%s269 + $0x4] sm:$0xf]
        %v324 = vld [vmem:[%s269 + $0x8] sm:$0xf]
        %v325 = vld [vmem:[%s269 + $0xc] sm:$0xf]
        %v326 = vld [vmem:[%s269 + $0x10] sm:$0xf]
        %v327 = vld [vmem:[%s269 + $0x14] sm:$0xf]
        %v328 = vld [vmem:[%s269 + $0x18] sm:$0xf]
        %v329 = vld [vmem:[%s269 + $0x1c] sm:$0xf]
        %v330 = vld [vmem:[%s269 + $0x20] sm:$0xf]
        %v331 = vld [vmem:[%s269 + $0x24] sm:$0xf]
        %v332 = vld [vmem:[%s269 + $0x28] sm:$0xf]
        %v333 = vld [vmem:[%s269 + $0x2c] sm:$0xf]
        %v334 = vld [vmem:[%s269 + $0x30] sm:$0xf]
        %v335 = vld [vmem:[%s269 + $0x34] sm:$0xf]
        %v336 = vld [vmem:[%s269 + $0x38] sm:$0xf]
        %v337 = vld [vmem:[%s269 + $0x3c] sm:$0xf]
        %v338 = vld [vmem:[%s1] sm:$0xff]
        %v339 = vld [vmem:[%s1 + $0x8] sm:$0xff]
        %v340 = vld [vmem:[%s1 + $0x10] sm:$0xff]
        %v341 = vld [vmem:[%s1 + $0x18] sm:$0xff]
        %v342 = vld [vmem:[%s1 + $0x20] sm:$0xff]
        %v343 = vld [vmem:[%s1 + $0x28] sm:$0xff]
        %v344 = vld [vmem:[%s1 + $0x30] sm:$0xff]
        %v345 = vld [vmem:[%s1 + $0x38] sm:$0xff]
        %v346 = vld [vmem:[%s1 + $0x40] sm:$0xff]
        %v347 = vld [vmem:[%s1 + $0x48] sm:$0xff]
        %v348 = vld [vmem:[%s1 + $0x50] sm:$0xff]
        %v349 = vld [vmem:[%s1 + $0x58] sm:$0xff]
        %v350 = vld [vmem:[%s1 + $0x60] sm:$0xff]
        %v351 = vld [vmem:[%s1 + $0x68] sm:$0xff]
        %v352 = vld [vmem:[%s1 + $0x70] sm:$0xff]
        %v353 = vld [vmem:[%s1 + $0x78] sm:$0xff]
        %v354 = vld [vmem:[%s1 + $0x80] sm:$0xff]
        %v355 = vld [vmem:[%s1 + $0x88] sm:$0xff]
        %v356 = vld [vmem:[%s1 + $0x90] sm:$0xff]
        %v357 = vld [vmem:[%s1 + $0x98] sm:$0xff]
        %v358 = vld [vmem:[%s1 + $0xa0] sm:$0xff]
        %v359 = vld [vmem:[%s1 + $0xa8] sm:$0xff]
        %v360 = vld [vmem:[%s1 + $0xb0] sm:$0xff]
        %v361 = vld [vmem:[%s1 + $0xb8] sm:$0xff]
        %v362 = vld [vmem:[%s1 + $0xc0] sm:$0xff]
        %v363 = vld [vmem:[%s1 + $0xc8] sm:$0xff]
        %v364 = vld [vmem:[%s1 + $0xd0] sm:$0xff]
        %v365 = vld [vmem:[%s1 + $0xd8] sm:$0xff]
        %v366 = vld [vmem:[%s1 + $0xe0] sm:$0xff]
        %v367 = vld [vmem:[%s1 + $0xe8] sm:$0xff]
        %v368 = vld [vmem:[%s1 + $0xf0] sm:$0xff]
        %v369 = vld [vmem:[%s1 + $0xf8] sm:$0xff]
        %v386 = vunpack.c.l.b16 %v322
        %v387 = vunpack.c.l.b16 %v323
        %v388 = vunpack.c.l.b16 %v324
        %v389 = vunpack.c.l.b16 %v325
        %v390 = vunpack.c.l.b16 %v326
        %v391 = vunpack.c.l.b16 %v327
        %v392 = vunpack.c.l.b16 %v328
        %v393 = vunpack.c.l.b16 %v329
        %v394 = vunpack.c.l.b16 %v330
        %v395 = vunpack.c.l.b16 %v331
        %v396 = vunpack.c.l.b16 %v332
        %v397 = vunpack.c.l.b16 %v333
        %v398 = vunpack.c.l.b16 %v334
        %v399 = vunpack.c.l.b16 %v335
        %v400 = vunpack.c.l.b16 %v336
        %v401 = vunpack.c.l.b16 %v337
        %v402 = vpack.c.b16 %v387, %v386
        %v403 = vpack.c.b16 %v389, %v388
        %v404 = vpack.c.b16 %v391, %v390
        %v405 = vpack.c.b16 %v393, %v392
        %v406 = vpack.c.b16 %v395, %v394
        %v407 = vpack.c.b16 %v397, %v396
        %v408 = vpack.c.b16 %v399, %v398
        %v409 = vpack.c.b16 %v401, %v400
        %v450 = vunpack.c.l.b16 %v338
        %v451 = vunpack.c.h.b16 %v338
        %v452 = vunpack.c.l.b16 %v339
        %v453 = vunpack.c.h.b16 %v339
        %v454 = vunpack.c.l.b16 %v340
        %v455 = vunpack.c.h.b16 %v340
        %v456 = vunpack.c.l.b16 %v341
        %v457 = vunpack.c.h.b16 %v341
        %v458 = vunpack.c.l.b16 %v342
        %v459 = vunpack.c.h.b16 %v342
        %v460 = vunpack.c.l.b16 %v343
        %v461 = vunpack.c.h.b16 %v343
        %v462 = vunpack.c.l.b16 %v344
        %v463 = vunpack.c.h.b16 %v344
        %v464 = vunpack.c.l.b16 %v345
        %v465 = vunpack.c.h.b16 %v345
        %v466 = vunpack.c.l.b16 %v346
        %v467 = vunpack.c.h.b16 %v346
        %v468 = vunpack.c.l.b16 %v347
        %v469 = vunpack.c.h.b16 %v347
        %v470 = vunpack.c.l.b16 %v348
        %v471 = vunpack.c.h.b16 %v348
        %v472 = vunpack.c.l.b16 %v349
        %v473 = vunpack.c.h.b16 %v349
        %v474 = vunpack.c.l.b16 %v350
        %v475 = vunpack.c.h.b16 %v350
        %v476 = vunpack.c.l.b16 %v351
        %v477 = vunpack.c.h.b16 %v351
        %v478 = vunpack.c.l.b16 %v352
        %v479 = vunpack.c.h.b16 %v352
        %v480 = vunpack.c.l.b16 %v353
        %v481 = vunpack.c.h.b16 %v353
        %v482 = vunpack.c.l.b16 %v354
        %v483 = vunpack.c.h.b16 %v354
        %v484 = vunpack.c.l.b16 %v355
        %v485 = vunpack.c.h.b16 %v355
        %v486 = vunpack.c.l.b16 %v356
        %v487 = vunpack.c.h.b16 %v356
        %v488 = vunpack.c.l.b16 %v357
        %v489 = vunpack.c.h.b16 %v357
        %v490 = vunpack.c.l.b16 %v358
        %v491 = vunpack.c.h.b16 %v358
        %v492 = vunpack.c.l.b16 %v359
        %v493 = vunpack.c.h.b16 %v359
        %v494 = vunpack.c.l.b16 %v360
        %v495 = vunpack.c.h.b16 %v360
        %v496 = vunpack.c.l.b16 %v361
        %v497 = vunpack.c.h.b16 %v361
        %v498 = vunpack.c.l.b16 %v362
        %v499 = vunpack.c.h.b16 %v362
        %v500 = vunpack.c.l.b16 %v363
        %v501 = vunpack.c.h.b16 %v363
        %v502 = vunpack.c.l.b16 %v364
        %v503 = vunpack.c.h.b16 %v364
        %v504 = vunpack.c.l.b16 %v365
        %v505 = vunpack.c.h.b16 %v365
        %v506 = vunpack.c.l.b16 %v366
        %v507 = vunpack.c.h.b16 %v366
        %v508 = vunpack.c.l.b16 %v367
        %v509 = vunpack.c.h.b16 %v367
        %v510 = vunpack.c.l.b16 %v368
        %v511 = vunpack.c.h.b16 %v368
        %v512 = vunpack.c.l.b16 %v369
        %v513 = vunpack.c.h.b16 %v369
        %v514 = vpack.c.b16 %v454, %v450
        %v515 = vpack.c.b16 %v455, %v451
        %v516 = vpack.c.b16 %v456, %v452
        %v517 = vpack.c.b16 %v457, %v453
        %v518 = vpack.c.b16 %v462, %v458
        %v519 = vpack.c.b16 %v463, %v459
        %v520 = vpack.c.b16 %v464, %v460
        %v521 = vpack.c.b16 %v465, %v461
        %v522 = vpack.c.b16 %v470, %v466
        %v523 = vpack.c.b16 %v471, %v467
        %v524 = vpack.c.b16 %v472, %v468
        %v525 = vpack.c.b16 %v473, %v469
        %v526 = vpack.c.b16 %v478, %v474
        %v527 = vpack.c.b16 %v479, %v475
        %v528 = vpack.c.b16 %v480, %v476
        %v529 = vpack.c.b16 %v481, %v477
        %v530 = vpack.c.b16 %v486, %v482
        %v531 = vpack.c.b16 %v487, %v483
        %v532 = vpack.c.b16 %v488, %v484
        %v533 = vpack.c.b16 %v489, %v485
        %v534 = vpack.c.b16 %v494, %v490
        %v535 = vpack.c.b16 %v495, %v491
        %v536 = vpack.c.b16 %v496, %v492
        %v537 = vpack.c.b16 %v497, %v493
        %v538 = vpack.c.b16 %v502, %v498
        %v539 = vpack.c.b16 %v503, %v499
        %v540 = vpack.c.b16 %v504, %v500
        %v541 = vpack.c.b16 %v505, %v501
        %v542 = vpack.c.b16 %v510, %v506
        %v543 = vpack.c.b16 %v511, %v507
        %v544 = vpack.c.b16 %v512, %v508
        %v545 = vpack.c.b16 %v513, %v509
        %578 = vmatprep.subr.bf16.mxu0 %v515
        %579 = vmatpush1.bf16.msra.mxu0 %v514
        %580 = vmatprep.subr.bf16.mxu0 %v519
        %581 = vmatpush1.bf16.msra.mxu0 %v518
        %582 = vmatprep.subr.bf16.mxu0 %v523
        %583 = vmatpush1.bf16.msra.mxu0 %v522
        %584 = vmatprep.subr.bf16.mxu0 %v527
        %585 = vmatpush1.bf16.msra.mxu0 %v526
        %586 = vmatprep.subr.bf16.mxu0 %v531
        %587 = vmatpush1.bf16.msra.mxu0 %v530
        %588 = vmatprep.subr.bf16.mxu0 %v535
        %589 = vmatpush1.bf16.msra.mxu0 %v534
        %590 = vmatprep.subr.bf16.mxu0 %v539
        %591 = vmatpush1.bf16.msra.mxu0 %v538
        %592 = vmatprep.subr.bf16.mxu0 %v543
        %593 = vmatpush1.bf16.msra.mxu0 %v542
        %594 = vmatprep.subr.bf16.mxu0 0
        %595 = vmatpush1.bf16.msra.mxu0 0
        %596 = vmatprep.subr.bf16.mxu0 0
        %597 = vmatpush1.bf16.msra.mxu0 0
        %598 = vmatprep.subr.bf16.mxu0 0
        %599 = vmatpush1.bf16.msra.mxu0 0
        %600 = vmatprep.subr.bf16.mxu0 0
        %601 = vmatpush1.bf16.msra.mxu0 0
        %602 = vmatprep.subr.bf16.mxu0 0
        %603 = vmatpush1.bf16.msra.mxu0 0
        %604 = vmatprep.subr.bf16.mxu0 0
        %605 = vmatpush1.bf16.msra.mxu0 0
        %606 = vmatprep.subr.bf16.mxu0 0
        %607 = vmatpush1.bf16.msra.mxu0 0
        %608 = vmatprep.subr.bf16.mxu0 0
        %609 = vmatpush1.bf16.msra.mxu0 0
        %610 = vmatprep.mubr.bf16.mxu0 0
        %611 = vmatmul.mubr.bf16.gmra.mrb[0].mxu0 %v402
        %v612 = vpop.f32.mrb[0].mxu0
        %v613 = vadd.f32 0.0, %v612
        %v614 = vpop.f32.mrb[0].mxu0
        %v615 = vadd.f32 0.0, %v614
        %v616 = vpop.f32.mrb[0].mxu0
        %v617 = vadd.f32 0.0, %v616
        %v618 = vpop.f32.mrb[0].mxu0
        %v619 = vadd.f32 0.0, %v618
        %620 = vmatprep.mubr.bf16.mxu0 0
        %621 = vmatmul.mubr.bf16.gmra.mrb[0].mxu0 %v403
        %v622 = vpop.f32.mrb[0].mxu0
        %v623 = vadd.f32 0.0, %v622
        %v624 = vpop.f32.mrb[0].mxu0
        %v625 = vadd.f32 0.0, %v624
        %v626 = vpop.f32.mrb[0].mxu0
        %v627 = vadd.f32 0.0, %v626
        %v628 = vpop.f32.mrb[0].mxu0
        %v629 = vadd.f32 0.0, %v628
        %630 = vmatprep.mubr.bf16.mxu0 0
        %631 = vmatmul.mubr.bf16.gmra.mrb[0].mxu0 %v404
        %v632 = vpop.f32.mrb[0].mxu0
        %v633 = vadd.f32 0.0, %v632
        %v634 = vpop.f32.mrb[0].mxu0
        %v635 = vadd.f32 0.0, %v634
        %v636 = vpop.f32.mrb[0].mxu0
        %v637 = vadd.f32 0.0, %v636
        %v638 = vpop.f32.mrb[0].mxu0
        %v639 = vadd.f32 0.0, %v638
        %640 = vmatprep.mubr.bf16.mxu0 0
        %641 = vmatmul.mubr.bf16.gmra.mrb[0].mxu0 %v405
        %v642 = vpop.f32.mrb[0].mxu0
        %v643 = vadd.f32 0.0, %v642
        %v644 = vpop.f32.mrb[0].mxu0
        %v645 = vadd.f32 0.0, %v644
        %v646 = vpop.f32.mrb[0].mxu0
        %v647 = vadd.f32 0.0, %v646
        %v648 = vpop.f32.mrb[0].mxu0
        %v649 = vadd.f32 0.0, %v648
        %650 = vmatprep.mubr.bf16.mxu0 0
        %651 = vmatmul.mubr.bf16.gmra.mrb[0].mxu0 %v406
        %v652 = vpop.f32.mrb[0].mxu0
        %v653 = vadd.f32 0.0, %v652
        %v654 = vpop.f32.mrb[0].mxu0
        %v655 = vadd.f32 0.0, %v654
        %v656 = vpop.f32.mrb[0].mxu0
        %v657 = vadd.f32 0.0, %v656
        %v658 = vpop.f32.mrb[0].mxu0
        %v659 = vadd.f32 0.0, %v658
        %660 = vmatprep.mubr.bf16.mxu0 0
        %661 = vmatmul.mubr.bf16.gmra.mrb[0].mxu0 %v407
        %v662 = vpop.f32.mrb[0].mxu0
        %v663 = vadd.f32 0.0, %v662
        %v664 = vpop.f32.mrb[0].mxu0
        %v665 = vadd.f32 0.0, %v664
        %v666 = vpop.f32.mrb[0].mxu0
        %v667 = vadd.f32 0.0, %v666
        %v668 = vpop.f32.mrb[0].mxu0
        %v669 = vadd.f32 0.0, %v668
        %670 = vmatprep.mubr.bf16.mxu0 0
        %671 = vmatmul.mubr.bf16.gmra.mrb[0].mxu0 %v408
        %v672 = vpop.f32.mrb[0].mxu0
        %v673 = vadd.f32 0.0, %v672
        %v674 = vpop.f32.mrb[0].mxu0
        %v675 = vadd.f32 0.0, %v674
        %v676 = vpop.f32.mrb[0].mxu0
        %v677 = vadd.f32 0.0, %v676
        %v678 = vpop.f32.mrb[0].mxu0
        %v679 = vadd.f32 0.0, %v678
        %680 = vmatprep.mubr.bf16.mxu0 0
        %681 = vmatmul.mubr.bf16.gmra.mrb[0].mxu0 %v409
        %v682 = vpop.f32.mrb[0].mxu0
        %v683 = vadd.f32 0.0, %v682
        %v684 = vpop.f32.mrb[0].mxu0
        %v685 = vadd.f32 0.0, %v684
        %v686 = vpop.f32.mrb[0].mxu0
        %v687 = vadd.f32 0.0, %v686
        %v688 = vpop.f32.mrb[0].mxu0
        %v689 = vadd.f32 0.0, %v688
        %690 = vdwg.mxu0
        %691 = vmatprep.subr.bf16.mxu0 %v517
        %692 = vmatpush1.bf16.msra.mxu0 %v516
        %693 = vmatprep.subr.bf16.mxu0 %v521
        %694 = vmatpush1.bf16.msra.mxu0 %v520
        %695 = vmatprep.subr.bf16.mxu0 %v525
        %696 = vmatpush1.bf16.msra.mxu0 %v524
        %697 = vmatprep.subr.bf16.mxu0 %v529
        %698 = vmatpush1.bf16.msra.mxu0 %v528
        %699 = vmatprep.subr.bf16.mxu0 %v533
        %700 = vmatpush1.bf16.msra.mxu0 %v532
        %701 = vmatprep.subr.bf16.mxu0 %v537
        %702 = vmatpush1.bf16.msra.mxu0 %v536
        %703 = vmatprep.subr.bf16.mxu0 %v541
        %704 = vmatpush1.bf16.msra.mxu0 %v540
        %705 = vmatprep.subr.bf16.mxu0 %v545
        %706 = vmatpush1.bf16.msra.mxu0 %v544
        %707 = vmatprep.subr.bf16.mxu0 0
        %708 = vmatpush1.bf16.msra.mxu0 0
        %709 = vmatprep.subr.bf16.mxu0 0
        %710 = vmatpush1.bf16.msra.mxu0 0
        %711 = vmatprep.subr.bf16.mxu0 0
        %712 = vmatpush1.bf16.msra.mxu0 0
        %713 = vmatprep.subr.bf16.mxu0 0
        %714 = vmatpush1.bf16.msra.mxu0 0
        %715 = vmatprep.subr.bf16.mxu0 0
        %716 = vmatpush1.bf16.msra.mxu0 0
        %717 = vmatprep.subr.bf16.mxu0 0
        %718 = vmatpush1.bf16.msra.mxu0 0
        %719 = vmatprep.subr.bf16.mxu0 0
        %720 = vmatpush1.bf16.msra.mxu0 0
        %721 = vmatprep.subr.bf16.mxu0 0
        %722 = vmatpush1.bf16.msra.mxu0 0
        %723 = vmatprep.mubr.bf16.mxu0 0
        %724 = vmatmul.mubr.bf16.gmra.mrb[0].mxu0 %v402
        %v725 = vpop.f32.mrb[0].mxu0
        %v726 = vadd.f32 0.0, %v725
        %v727 = vpop.f32.mrb[0].mxu0
        %v728 = vadd.f32 0.0, %v727
        %v729 = vpop.f32.mrb[0].mxu0
        %v730 = vadd.f32 0.0, %v729
        %v731 = vpop.f32.mrb[0].mxu0
        %v732 = vadd.f32 0.0, %v731
        %733 = vmatprep.mubr.bf16.mxu0 0
        %734 = vmatmul.mubr.bf16.gmra.mrb[0].mxu0 %v403
        %v735 = vpop.f32.mrb[0].mxu0
        %v736 = vadd.f32 0.0, %v735
        %v737 = vpop.f32.mrb[0].mxu0
        %v738 = vadd.f32 0.0, %v737
        %v739 = vpop.f32.mrb[0].mxu0
        %v740 = vadd.f32 0.0, %v739
        %v741 = vpop.f32.mrb[0].mxu0
        %v742 = vadd.f32 0.0, %v741
        %743 = vmatprep.mubr.bf16.mxu0 0
        %744 = vmatmul.mubr.bf16.gmra.mrb[0].mxu0 %v404
        %v745 = vpop.f32.mrb[0].mxu0
        %v746 = vadd.f32 0.0, %v745
        %v747 = vpop.f32.mrb[0].mxu0
        %v748 = vadd.f32 0.0, %v747
        %v749 = vpop.f32.mrb[0].mxu0
        %v750 = vadd.f32 0.0, %v749
        %v751 = vpop.f32.mrb[0].mxu0
        %v752 = vadd.f32 0.0, %v751
        %753 = vmatprep.mubr.bf16.mxu0 0
        %754 = vmatmul.mubr.bf16.gmra.mrb[0].mxu0 %v405
        %v755 = vpop.f32.mrb[0].mxu0
        %v756 = vadd.f32 0.0, %v755
        %v757 = vpop.f32.mrb[0].mxu0
        %v758 = vadd.f32 0.0, %v757
        %v759 = vpop.f32.mrb[0].mxu0
        %v760 = vadd.f32 0.0, %v759
        %v761 = vpop.f32.mrb[0].mxu0
        %v762 = vadd.f32 0.0, %v761
        %763 = vmatprep.mubr.bf16.mxu0 0
        %764 = vmatmul.mubr.bf16.gmra.mrb[0].mxu0 %v406
        %v765 = vpop.f32.mrb[0].mxu0
        %v766 = vadd.f32 0.0, %v765
        %v767 = vpop.f32.mrb[0].mxu0
        %v768 = vadd.f32 0.0, %v767
        %v769 = vpop.f32.mrb[0].mxu0
        %v770 = vadd.f32 0.0, %v769
        %v771 = vpop.f32.mrb[0].mxu0
        %v772 = vadd.f32 0.0, %v771
        %773 = vmatprep.mubr.bf16.mxu0 0
        %774 = vmatmul.mubr.bf16.gmra.mrb[0].mxu0 %v407
        %v775 = vpop.f32.mrb[0].mxu0
        %v776 = vadd.f32 0.0, %v775
        %v777 = vpop.f32.mrb[0].mxu0
        %v778 = vadd.f32 0.0, %v777
        %v779 = vpop.f32.mrb[0].mxu0
        %v780 = vadd.f32 0.0, %v779
        %v781 = vpop.f32.mrb[0].mxu0
        %v782 = vadd.f32 0.0, %v781
        %783 = vmatprep.mubr.bf16.mxu0 0
        %784 = vmatmul.mubr.bf16.gmra.mrb[0].mxu0 %v408
        %v785 = vpop.f32.mrb[0].mxu0
        %v786 = vadd.f32 0.0, %v785
        %v787 = vpop.f32.mrb[0].mxu0
        %v788 = vadd.f32 0.0, %v787
        %v789 = vpop.f32.mrb[0].mxu0
        %v790 = vadd.f32 0.0, %v789
        %v791 = vpop.f32.mrb[0].mxu0
        %v792 = vadd.f32 0.0, %v791
        %793 = vmatprep.mubr.bf16.mxu0 0
        %794 = vmatmul.mubr.bf16.gmra.mrb[0].mxu0 %v409
        %v795 = vpop.f32.mrb[0].mxu0
        %v796 = vadd.f32 0.0, %v795
        %v797 = vpop.f32.mrb[0].mxu0
        %v798 = vadd.f32 0.0, %v797
        %v799 = vpop.f32.mrb[0].mxu0
        %v800 = vadd.f32 0.0, %v799
        %v801 = vpop.f32.mrb[0].mxu0
        %v802 = vadd.f32 0.0, %v801
        %803 = vdwg.mxu0
        %v804 = vpack.c.bf16 %v617, %v613
        %v805 = vpack.c.bf16 %v619, %v615
        %v806 = vpack.c.bf16 %v730, %v726
        %v807 = vpack.c.bf16 %v732, %v728
        %v808 = vpack.c.bf16 %v627, %v623
        %v809 = vpack.c.bf16 %v629, %v625
        %v810 = vpack.c.bf16 %v740, %v736
        %v811 = vpack.c.bf16 %v742, %v738
        %v812 = vpack.c.bf16 %v637, %v633
        %v813 = vpack.c.bf16 %v639, %v635
        %v814 = vpack.c.bf16 %v750, %v746
        %v815 = vpack.c.bf16 %v752, %v748
        %v816 = vpack.c.bf16 %v647, %v643
        %v817 = vpack.c.bf16 %v649, %v645
        %v818 = vpack.c.bf16 %v760, %v756
        %v819 = vpack.c.bf16 %v762, %v758
        %v820 = vpack.c.bf16 %v657, %v653
        %v821 = vpack.c.bf16 %v659, %v655
        %v822 = vpack.c.bf16 %v770, %v766
        %v823 = vpack.c.bf16 %v772, %v768
        %v824 = vpack.c.bf16 %v667, %v663
        %v825 = vpack.c.bf16 %v669, %v665
        %v826 = vpack.c.bf16 %v780, %v776
        %v827 = vpack.c.bf16 %v782, %v778
        %v828 = vpack.c.bf16 %v677, %v673
        %v829 = vpack.c.bf16 %v679, %v675
        %v830 = vpack.c.bf16 %v790, %v786
        %v831 = vpack.c.bf16 %v792, %v788
        %v832 = vpack.c.bf16 %v687, %v683
        %v833 = vpack.c.bf16 %v689, %v685
        %v834 = vpack.c.bf16 %v800, %v796
        %v835 = vpack.c.bf16 %v802, %v798
        %v868 = vunpack.c.l.b16 %v804
        %v869 = vunpack.c.l.b16 %v805
        %v870 = vunpack.c.l.b16 %v806
        %v871 = vunpack.c.l.b16 %v807
        %v872 = vunpack.c.h.b16 %v804
        %v873 = vunpack.c.h.b16 %v805
        %v874 = vunpack.c.h.b16 %v806
        %v875 = vunpack.c.h.b16 %v807
        %v876 = vunpack.c.l.b16 %v808
        %v877 = vunpack.c.l.b16 %v809
        %v878 = vunpack.c.l.b16 %v810
        %v879 = vunpack.c.l.b16 %v811
        %v880 = vunpack.c.h.b16 %v808
        %v881 = vunpack.c.h.b16 %v809
        %v882 = vunpack.c.h.b16 %v810
        %v883 = vunpack.c.h.b16 %v811
        %v884 = vunpack.c.l.b16 %v812
        %v885 = vunpack.c.l.b16 %v813
        %v886 = vunpack.c.l.b16 %v814
        %v887 = vunpack.c.l.b16 %v815
        %v888 = vunpack.c.h.b16 %v812
        %v889 = vunpack.c.h.b16 %v813
        %v890 = vunpack.c.h.b16 %v814
        %v891 = vunpack.c.h.b16 %v815
        %v892 = vunpack.c.l.b16 %v816
        %v893 = vunpack.c.l.b16 %v817
        %v894 = vunpack.c.l.b16 %v818
        %v895 = vunpack.c.l.b16 %v819
        %v896 = vunpack.c.h.b16 %v816
        %v897 = vunpack.c.h.b16 %v817
        %v898 = vunpack.c.h.b16 %v818
        %v899 = vunpack.c.h.b16 %v819
        %v900 = vunpack.c.l.b16 %v820
        %v901 = vunpack.c.l.b16 %v821
        %v902 = vunpack.c.l.b16 %v822
        %v903 = vunpack.c.l.b16 %v823
        %v904 = vunpack.c.h.b16 %v820
        %v905 = vunpack.c.h.b16 %v821
        %v906 = vunpack.c.h.b16 %v822
        %v907 = vunpack.c.h.b16 %v823
        %v908 = vunpack.c.l.b16 %v824
        %v909 = vunpack.c.l.b16 %v825
        %v910 = vunpack.c.l.b16 %v826
        %v911 = vunpack.c.l.b16 %v827
        %v912 = vunpack.c.h.b16 %v824
        %v913 = vunpack.c.h.b16 %v825
        %v914 = vunpack.c.h.b16 %v826
        %v915 = vunpack.c.h.b16 %v827
        %v916 = vunpack.c.l.b16 %v828
        %v917 = vunpack.c.l.b16 %v829
        %v918 = vunpack.c.l.b16 %v830
        %v919 = vunpack.c.l.b16 %v831
        %v920 = vunpack.c.h.b16 %v828
        %v921 = vunpack.c.h.b16 %v829
        %v922 = vunpack.c.h.b16 %v830
        %v923 = vunpack.c.h.b16 %v831
        %v924 = vunpack.c.l.b16 %v832
        %v925 = vunpack.c.l.b16 %v833
        %v926 = vunpack.c.l.b16 %v834
        %v927 = vunpack.c.l.b16 %v835
        %v928 = vunpack.c.h.b16 %v832
        %v929 = vunpack.c.h.b16 %v833
        %v930 = vunpack.c.h.b16 %v834
        %v931 = vunpack.c.h.b16 %v835
        %v932 = vpack.c.b16 %v869, %v868
        %v933 = vpack.c.b16 %v871, %v870
        %v934 = vpack.c.b16 %v873, %v872
        %v935 = vpack.c.b16 %v875, %v874
        %v936 = vpack.c.b16 %v877, %v876
        %v937 = vpack.c.b16 %v879, %v878
        %v938 = vpack.c.b16 %v881, %v880
        %v939 = vpack.c.b16 %v883, %v882
        %v940 = vpack.c.b16 %v885, %v884
        %v941 = vpack.c.b16 %v887, %v886
        %v942 = vpack.c.b16 %v889, %v888
        %v943 = vpack.c.b16 %v891, %v890
        %v944 = vpack.c.b16 %v893, %v892
        %v945 = vpack.c.b16 %v895, %v894
        %v946 = vpack.c.b16 %v897, %v896
        %v947 = vpack.c.b16 %v899, %v898
        %v948 = vpack.c.b16 %v901, %v900
        %v949 = vpack.c.b16 %v903, %v902
        %v950 = vpack.c.b16 %v905, %v904
        %v951 = vpack.c.b16 %v907, %v906
        %v952 = vpack.c.b16 %v909, %v908
        %v953 = vpack.c.b16 %v911, %v910
        %v954 = vpack.c.b16 %v913, %v912
        %v955 = vpack.c.b16 %v915, %v914
        %v956 = vpack.c.b16 %v917, %v916
        %v957 = vpack.c.b16 %v919, %v918
        %v958 = vpack.c.b16 %v921, %v920
        %v959 = vpack.c.b16 %v923, %v922
        %v960 = vpack.c.b16 %v925, %v924
        %v961 = vpack.c.b16 %v927, %v926
        %v962 = vpack.c.b16 %v929, %v928
        %v963 = vpack.c.b16 %v931, %v930
        %996 = vst [vmem:[%s304] sm:$0xff] %v932
        %997 = vst [vmem:[%s304 + $0x8] sm:$0xff] %v933
        %998 = vst [vmem:[%s304 + $0x10] sm:$0xff] %v934
        %999 = vst [vmem:[%s304 + $0x18] sm:$0xff] %v935
        %1000 = vst [vmem:[%s304 + $0x20] sm:$0xff] %v936
        %1001 = vst [vmem:[%s304 + $0x28] sm:$0xff] %v937
        %1002 = vst [vmem:[%s304 + $0x30] sm:$0xff] %v938
        %1003 = vst [vmem:[%s304 + $0x38] sm:$0xff] %v939
        %1004 = vst [vmem:[%s304 + $0x40] sm:$0xff] %v940
        %1005 = vst [vmem:[%s304 + $0x48] sm:$0xff] %v941
        %1006 = vst [vmem:[%s304 + $0x50] sm:$0xff] %v942
        %1007 = vst [vmem:[%s304 + $0x58] sm:$0xff] %v943
        %1008 = vst [vmem:[%s304 + $0x60] sm:$0xff] %v944
        %1009 = vst [vmem:[%s304 + $0x68] sm:$0xff] %v945
        %1010 = vst [vmem:[%s304 + $0x70] sm:$0xff] %v946
        %1011 = vst [vmem:[%s304 + $0x78] sm:$0xff] %v947
        %1012 = vst [vmem:[%s304 + $0x80] sm:$0xff] %v948
        %1013 = vst [vmem:[%s304 + $0x88] sm:$0xff] %v949
        %1014 = vst [vmem:[%s304 + $0x90] sm:$0xff] %v950
        %1015 = vst [vmem:[%s304 + $0x98] sm:$0xff] %v951
        %1016 = vst [vmem:[%s304 + $0xa0] sm:$0xff] %v952
        %1017 = vst [vmem:[%s304 + $0xa8] sm:$0xff] %v953
        %1018 = vst [vmem:[%s304 + $0xb0] sm:$0xff] %v954
        %1019 = vst [vmem:[%s304 + $0xb8] sm:$0xff] %v955
        %1020 = vst [vmem:[%s304 + $0xc0] sm:$0xff] %v956
        %1021 = vst [vmem:[%s304 + $0xc8] sm:$0xff] %v957
        %1022 = vst [vmem:[%s304 + $0xd0] sm:$0xff] %v958
        %1023 = vst [vmem:[%s304 + $0xd8] sm:$0xff] %v959
        %1024 = vst [vmem:[%s304 + $0xe0] sm:$0xff] %v960
        %1025 = vst [vmem:[%s304 + $0xe8] sm:$0xff] %v961
        %1026 = vst [vmem:[%s304 + $0xf0] sm:$0xff] %v962
        %1027 = vst [vmem:[%s304 + $0xf8] sm:$0xff] %v963
        %v1028 = vld [vmem:[#allocation5] sm:$0xff]
        %v1029 = vld [vmem:[#allocation5 + $0x8] sm:$0xf]
        %v1030 = vld [vmem:[#allocation5 + $0xc] sm:$0xff]
        %v1031 = vld [vmem:[#allocation5 + $0x14] sm:$0xf]
        %v1032 = vld [vmem:[#allocation5 + $0x18] sm:$0xff]
        %v1033 = vld [vmem:[#allocation5 + $0x20] sm:$0xf]
        %v1034 = vld [vmem:[#allocation5 + $0x24] sm:$0xff]
        %v1035 = vld [vmem:[#allocation5 + $0x2c] sm:$0xf]
        %v1036 = vld [vmem:[#allocation5 + $0x30] sm:$0xff]
        %v1037 = vld [vmem:[#allocation5 + $0x38] sm:$0xf]
        %v1038 = vld [vmem:[#allocation5 + $0x3c] sm:$0xff]
        %v1039 = vld [vmem:[#allocation5 + $0x44] sm:$0xf]
        %v1040 = vld [vmem:[#allocation5 + $0x48] sm:$0xff]
        %v1041 = vld [vmem:[#allocation5 + $0x50] sm:$0xf]
        %v1042 = vld [vmem:[#allocation5 + $0x54] sm:$0xff]
        %v1043 = vld [vmem:[#allocation5 + $0x5c] sm:$0xf]
        %v1044 = vld [vmem:[#allocation5 + $0x60] sm:$0xff]
        %v1045 = vld [vmem:[#allocation5 + $0x68] sm:$0xf]
        %v1046 = vld [vmem:[#allocation5 + $0x6c] sm:$0xff]
        %v1047 = vld [vmem:[#allocation5 + $0x74] sm:$0xf]
        %v1048 = vld [vmem:[#allocation5 + $0x78] sm:$0xff]
        %v1049 = vld [vmem:[#allocation5 + $0x80] sm:$0xf]
        %v1050 = vld [vmem:[#allocation5 + $0x84] sm:$0xff]
        %v1051 = vld [vmem:[#allocation5 + $0x8c] sm:$0xf]
        %v1052 = vld [vmem:[#allocation5 + $0x90] sm:$0xff]
        %v1053 = vld [vmem:[#allocation5 + $0x98] sm:$0xf]
        %v1054 = vld [vmem:[#allocation5 + $0x9c] sm:$0xff]
        %v1055 = vld [vmem:[#allocation5 + $0xa4] sm:$0xf]
        %v1056 = vld [vmem:[#allocation5 + $0xa8] sm:$0xff]
        %v1057 = vld [vmem:[#allocation5 + $0xb0] sm:$0xf]
        %v1058 = vld [vmem:[#allocation5 + $0xb4] sm:$0xff]
        %v1059 = vld [vmem:[#allocation5 + $0xbc] sm:$0xf]
        %v1060 = vld [vmem:[%s3] sm:$0x7]
        %v1062 = vlaneseq
        %v1063 = vshrl.u32 %v1062, 7
        %v1064 = vsub.s32 0, %v1063
        %v1065 = vrot.slane %v1060, %v1064
        %v1066 = vlaneseq
        %v1067 = vshrl.u32 %v1066, 7
        %v1068 = vsub.s32 1, %v1067
        %v1069 = vrot.slane %v1060, %v1068
        %v1070 = vlaneseq
        %v1071 = vshrl.u32 %v1070, 7
        %v1072 = vsub.s32 2, %v1071
        %v1073 = vrot.slane %v1060, %v1072
        %v1109 = vunpack.c.l.b16 %v1028
        %v1110 = vunpack.c.h.b16 %v1028
        %v1111 = vunpack.c.l.b16 %v1029
        %v1112 = vunpack.c.l.b16 %v1030
        %v1113 = vunpack.c.h.b16 %v1030
        %v1114 = vunpack.c.l.b16 %v1031
        %v1115 = vunpack.c.l.b16 %v1032
        %v1116 = vunpack.c.h.b16 %v1032
        %v1117 = vunpack.c.l.b16 %v1033
        %v1118 = vunpack.c.l.b16 %v1034
        %v1119 = vunpack.c.h.b16 %v1034
        %v1120 = vunpack.c.l.b16 %v1035
        %v1121 = vunpack.c.l.b16 %v1036
        %v1122 = vunpack.c.h.b16 %v1036
        %v1123 = vunpack.c.l.b16 %v1037
        %v1124 = vunpack.c.l.b16 %v1038
        %v1125 = vunpack.c.h.b16 %v1038
        %v1126 = vunpack.c.l.b16 %v1039
        %v1127 = vunpack.c.l.b16 %v1040
        %v1128 = vunpack.c.h.b16 %v1040
        %v1129 = vunpack.c.l.b16 %v1041
        %v1130 = vunpack.c.l.b16 %v1042
        %v1131 = vunpack.c.h.b16 %v1042
        %v1132 = vunpack.c.l.b16 %v1043
        %v1133 = vunpack.c.l.b16 %v1044
        %v1134 = vunpack.c.h.b16 %v1044
        %v1135 = vunpack.c.l.b16 %v1045
        %v1136 = vunpack.c.l.b16 %v1046
        %v1137 = vunpack.c.h.b16 %v1046
        %v1138 = vunpack.c.l.b16 %v1047
        %v1139 = vunpack.c.l.b16 %v1048
        %v1140 = vunpack.c.h.b16 %v1048
        %v1141 = vunpack.c.l.b16 %v1049
        %v1142 = vunpack.c.l.b16 %v1050
        %v1143 = vunpack.c.h.b16 %v1050
        %v1144 = vunpack.c.l.b16 %v1051
        %v1145 = vunpack.c.l.b16 %v1052
        %v1146 = vunpack.c.h.b16 %v1052
        %v1147 = vunpack.c.l.b16 %v1053
        %v1148 = vunpack.c.l.b16 %v1054
        %v1149 = vunpack.c.h.b16 %v1054
        %v1150 = vunpack.c.l.b16 %v1055
        %v1151 = vunpack.c.l.b16 %v1056
        %v1152 = vunpack.c.h.b16 %v1056
        %v1153 = vunpack.c.l.b16 %v1057
        %v1154 = vunpack.c.l.b16 %v1058
        %v1155 = vunpack.c.h.b16 %v1058
        %v1156 = vunpack.c.l.b16 %v1059
        %v1157 = vpack.c.b16 %v1112, %v1109
        %v1158 = vpack.c.b16 %v1113, %v1110
        %v1159 = vpack.c.b16 %v1114, %v1111
        %v1160 = vpack.c.b16 %v1118, %v1115
        %v1161 = vpack.c.b16 %v1119, %v1116
        %v1162 = vpack.c.b16 %v1120, %v1117
        %v1163 = vpack.c.b16 %v1124, %v1121
        %v1164 = vpack.c.b16 %v1125, %v1122
        %v1165 = vpack.c.b16 %v1126, %v1123
        %v1166 = vpack.c.b16 %v1130, %v1127
        %v1167 = vpack.c.b16 %v1131, %v1128
        %v1168 = vpack.c.b16 %v1132, %v1129
        %v1169 = vpack.c.b16 %v1136, %v1133
        %v1170 = vpack.c.b16 %v1137, %v1134
        %v1171 = vpack.c.b16 %v1138, %v1135
        %v1172 = vpack.c.b16 %v1142, %v1139
        %v1173 = vpack.c.b16 %v1143, %v1140
        %v1174 = vpack.c.b16 %v1144, %v1141
        %v1175 = vpack.c.b16 %v1148, %v1145
        %v1176 = vpack.c.b16 %v1149, %v1146
        %v1177 = vpack.c.b16 %v1150, %v1147
        %v1178 = vpack.c.b16 %v1154, %v1151
        %v1179 = vpack.c.b16 %v1155, %v1152
        %v1180 = vpack.c.b16 %v1156, %v1153
        %1205 = vmatprep.subr.bf16.mxu0 %v1158
        %1206 = vmatpush1.bf16.msra.mxu0 %v1157
        %1207 = vmatprep.subr.bf16.mxu0 %v1161
        %1208 = vmatpush1.bf16.msra.mxu0 %v1160
        %1209 = vmatprep.subr.bf16.mxu0 %v1164
        %1210 = vmatpush1.bf16.msra.mxu0 %v1163
        %1211 = vmatprep.subr.bf16.mxu0 %v1167
        %1212 = vmatpush1.bf16.msra.mxu0 %v1166
        %1213 = vmatprep.subr.bf16.mxu0 %v1170
        %1214 = vmatpush1.bf16.msra.mxu0 %v1169
        %1215 = vmatprep.subr.bf16.mxu0 %v1173
        %1216 = vmatpush1.bf16.msra.mxu0 %v1172
        %1217 = vmatprep.subr.bf16.mxu0 %v1176
        %1218 = vmatpush1.bf16.msra.mxu0 %v1175
        %1219 = vmatprep.subr.bf16.mxu0 %v1179
        %1220 = vmatpush1.bf16.msra.mxu0 %v1178
        %1221 = vmatprep.subr.bf16.mxu0 0
        %1222 = vmatpush1.bf16.msra.mxu0 0
        %1223 = vmatprep.subr.bf16.mxu0 0
        %1224 = vmatpush1.bf16.msra.mxu0 0
        %1225 = vmatprep.subr.bf16.mxu0 0
        %1226 = vmatpush1.bf16.msra.mxu0 0
        %1227 = vmatprep.subr.bf16.mxu0 0
        %1228 = vmatpush1.bf16.msra.mxu0 0
        %1229 = vmatprep.subr.bf16.mxu0 0
        %1230 = vmatpush1.bf16.msra.mxu0 0
        %1231 = vmatprep.subr.bf16.mxu0 0
        %1232 = vmatpush1.bf16.msra.mxu0 0
        %1233 = vmatprep.subr.bf16.mxu0 0
        %1234 = vmatpush1.bf16.msra.mxu0 0
        %1235 = vmatprep.subr.bf16.mxu0 0
        %1236 = vmatpush1.bf16.msra.mxu0 0
        %1237 = vmatprep.mubr.bf16.mxu0 0
        %1238 = vmatmul.mubr.bf16.gmra.mrb[0].mxu0 %v402
        %v1239 = vpop.f32.mrb[0].mxu0
        %v1240 = vadd.f32 %v1065, %v1239
        %v1241 = vpop.f32.mrb[0].mxu0
        %v1242 = vadd.f32 %v1069, %v1241
        %v1243 = vpop.f32.mrb[0].mxu0
        %v1244 = vadd.f32 %v1065, %v1243
        %v1245 = vpop.f32.mrb[0].mxu0
        %v1246 = vadd.f32 %v1069, %v1245
        %1247 = vmatprep.mubr.bf16.mxu0 0
        %1248 = vmatmul.mubr.bf16.gmra.mrb[0].mxu0 %v403
        %v1249 = vpop.f32.mrb[0].mxu0
        %v1250 = vadd.f32 %v1065, %v1249
        %v1251 = vpop.f32.mrb[0].mxu0
        %v1252 = vadd.f32 %v1069, %v1251
        %v1253 = vpop.f32.mrb[0].mxu0
        %v1254 = vadd.f32 %v1065, %v1253
        %v1255 = vpop.f32.mrb[0].mxu0
        %v1256 = vadd.f32 %v1069, %v1255
        %1257 = vmatprep.mubr.bf16.mxu0 0
        %1258 = vmatmul.mubr.bf16.gmra.mrb[0].mxu0 %v404
        %v1259 = vpop.f32.mrb[0].mxu0
        %v1260 = vadd.f32 %v1065, %v1259
        %v1261 = vpop.f32.mrb[0].mxu0
        %v1262 = vadd.f32 %v1069, %v1261
        %v1263 = vpop.f32.mrb[0].mxu0
        %v1264 = vadd.f32 %v1065, %v1263
        %v1265 = vpop.f32.mrb[0].mxu0
        %v1266 = vadd.f32 %v1069, %v1265
        %1267 = vmatprep.mubr.bf16.mxu0 0
        %1268 = vmatmul.mubr.bf16.gmra.mrb[0].mxu0 %v405
        %v1269 = vpop.f32.mrb[0].mxu0
        %v1270 = vadd.f32 %v1065, %v1269
        %v1271 = vpop.f32.mrb[0].mxu0
        %v1272 = vadd.f32 %v1069, %v1271
        %v1273 = vpop.f32.mrb[0].mxu0
        %v1274 = vadd.f32 %v1065, %v1273
        %v1275 = vpop.f32.mrb[0].mxu0
        %v1276 = vadd.f32 %v1069, %v1275
        %1277 = vmatprep.mubr.bf16.mxu0 0
        %1278 = vmatmul.mubr.bf16.gmra.mrb[0].mxu0 %v406
        %v1279 = vpop.f32.mrb[0].mxu0
        %v1280 = vadd.f32 %v1065, %v1279
        %v1281 = vpop.f32.mrb[0].mxu0
        %v1282 = vadd.f32 %v1069, %v1281
        %v1283 = vpop.f32.mrb[0].mxu0
        %v1284 = vadd.f32 %v1065, %v1283
        %v1285 = vpop.f32.mrb[0].mxu0
        %v1286 = vadd.f32 %v1069, %v1285
        %1287 = vmatprep.mubr.bf16.mxu0 0
        %1288 = vmatmul.mubr.bf16.gmra.mrb[0].mxu0 %v407
        %v1289 = vpop.f32.mrb[0].mxu0
        %v1290 = vadd.f32 %v1065, %v1289
        %v1291 = vpop.f32.mrb[0].mxu0
        %v1292 = vadd.f32 %v1069, %v1291
        %v1293 = vpop.f32.mrb[0].mxu0
        %v1294 = vadd.f32 %v1065, %v1293
        %v1295 = vpop.f32.mrb[0].mxu0
        %v1296 = vadd.f32 %v1069, %v1295
        %1297 = vmatprep.mubr.bf16.mxu0 0
        %1298 = vmatmul.mubr.bf16.gmra.mrb[0].mxu0 %v408
        %v1299 = vpop.f32.mrb[0].mxu0
        %v1300 = vadd.f32 %v1065, %v1299
        %v1301 = vpop.f32.mrb[0].mxu0
        %v1302 = vadd.f32 %v1069, %v1301
        %v1303 = vpop.f32.mrb[0].mxu0
        %v1304 = vadd.f32 %v1065, %v1303
        %v1305 = vpop.f32.mrb[0].mxu0
        %v1306 = vadd.f32 %v1069, %v1305
        %1307 = vmatprep.mubr.bf16.mxu0 0
        %1308 = vmatmul.mubr.bf16.gmra.mrb[0].mxu0 %v409
        %v1309 = vpop.f32.mrb[0].mxu0
        %v1310 = vadd.f32 %v1065, %v1309
        %v1311 = vpop.f32.mrb[0].mxu0
        %v1312 = vadd.f32 %v1069, %v1311
        %v1313 = vpop.f32.mrb[0].mxu0
        %v1314 = vadd.f32 %v1065, %v1313
        %v1315 = vpop.f32.mrb[0].mxu0
        %v1316 = vadd.f32 %v1069, %v1315
        %1317 = vdwg.mxu0
        %1318 = vmatprep.subr.bf16.mxu0 0
        %1319 = vmatpush1.bf16.msra.mxu0 %v1159
        %1320 = vmatprep.subr.bf16.mxu0 0
        %1321 = vmatpush1.bf16.msra.mxu0 %v1162
        %1322 = vmatprep.subr.bf16.mxu0 0
        %1323 = vmatpush1.bf16.msra.mxu0 %v1165
        %1324 = vmatprep.subr.bf16.mxu0 0
        %1325 = vmatpush1.bf16.msra.mxu0 %v1168
        %1326 = vmatprep.subr.bf16.mxu0 0
        %1327 = vmatpush1.bf16.msra.mxu0 %v1171
        %1328 = vmatprep.subr.bf16.mxu0 0
        %1329 = vmatpush1.bf16.msra.mxu0 %v1174
        %1330 = vmatprep.subr.bf16.mxu0 0
        %1331 = vmatpush1.bf16.msra.mxu0 %v1177
        %1332 = vmatprep.subr.bf16.mxu0 0
        %1333 = vmatpush1.bf16.msra.mxu0 %v1180
        %1334 = vmatprep.subr.bf16.mxu0 0
        %1335 = vmatpush1.bf16.msra.mxu0 0
        %1336 = vmatprep.subr.bf16.mxu0 0
        %1337 = vmatpush1.bf16.msra.mxu0 0
        %1338 = vmatprep.subr.bf16.mxu0 0
        %1339 = vmatpush1.bf16.msra.mxu0 0
        %1340 = vmatprep.subr.bf16.mxu0 0
        %1341 = vmatpush1.bf16.msra.mxu0 0
        %1342 = vmatprep.subr.bf16.mxu0 0
        %1343 = vmatpush1.bf16.msra.mxu0 0
        %1344 = vmatprep.subr.bf16.mxu0 0
        %1345 = vmatpush1.bf16.msra.mxu0 0
        %1346 = vmatprep.subr.bf16.mxu0 0
        %1347 = vmatpush1.bf16.msra.mxu0 0
        %1348 = vmatprep.subr.bf16.mxu0 0
        %1349 = vmatpush1.bf16.msra.mxu0 0
        %1350 = vmatprep.mubr.bf16.mxu0 0
        %1351 = vmatmul.mubr.bf16.gmra.mrb[0].mxu0 %v402
        %v1352 = vpop.f32.mrb[0].mxu0
        %v1353 = vadd.f32 %v1073, %v1352
        %v1354 = vpop.f32.mrb[0].mxu0
        %v1355 = vpop.f32.mrb[0].mxu0
        %v1356 = vadd.f32 %v1073, %v1355
        %v1357 = vpop.f32.mrb[0].mxu0
        %1358 = vmatprep.mubr.bf16.mxu0 0
        %1359 = vmatmul.mubr.bf16.gmra.mrb[0].mxu0 %v403
        %v1360 = vpop.f32.mrb[0].mxu0
        %v1361 = vadd.f32 %v1073, %v1360
        %v1362 = vpop.f32.mrb[0].mxu0
        %v1363 = vpop.f32.mrb[0].mxu0
        %v1364 = vadd.f32 %v1073, %v1363
        %v1365 = vpop.f32.mrb[0].mxu0
        %1366 = vmatprep.mubr.bf16.mxu0 0
        %1367 = vmatmul.mubr.bf16.gmra.mrb[0].mxu0 %v404
        %v1368 = vpop.f32.mrb[0].mxu0
        %v1369 = vadd.f32 %v1073, %v1368
        %v1370 = vpop.f32.mrb[0].mxu0
        %v1371 = vpop.f32.mrb[0].mxu0
        %v1372 = vadd.f32 %v1073, %v1371
        %v1373 = vpop.f32.mrb[0].mxu0
        %1374 = vmatprep.mubr.bf16.mxu0 0
        %1375 = vmatmul.mubr.bf16.gmra.mrb[0].mxu0 %v405
        %v1376 = vpop.f32.mrb[0].mxu0
        %v1377 = vadd.f32 %v1073, %v1376
        %v1378 = vpop.f32.mrb[0].mxu0
        %v1379 = vpop.f32.mrb[0].mxu0
        %v1380 = vadd.f32 %v1073, %v1379
        %v1381 = vpop.f32.mrb[0].mxu0
        %1382 = vmatprep.mubr.bf16.mxu0 0
        %1383 = vmatmul.mubr.bf16.gmra.mrb[0].mxu0 %v406
        %v1384 = vpop.f32.mrb[0].mxu0
        %v1385 = vadd.f32 %v1073, %v1384
        %v1386 = vpop.f32.mrb[0].mxu0
        %v1387 = vpop.f32.mrb[0].mxu0
        %v1388 = vadd.f32 %v1073, %v1387
        %v1389 = vpop.f32.mrb[0].mxu0
        %1390 = vmatprep.mubr.bf16.mxu0 0
        %1391 = vmatmul.mubr.bf16.gmra.mrb[0].mxu0 %v407
        %v1392 = vpop.f32.mrb[0].mxu0
        %v1393 = vadd.f32 %v1073, %v1392
        %v1394 = vpop.f32.mrb[0].mxu0
        %v1395 = vpop.f32.mrb[0].mxu0
        %v1396 = vadd.f32 %v1073, %v1395
        %v1397 = vpop.f32.mrb[0].mxu0
        %1398 = vmatprep.mubr.bf16.mxu0 0
        %1399 = vmatmul.mubr.bf16.gmra.mrb[0].mxu0 %v408
        %v1400 = vpop.f32.mrb[0].mxu0
        %v1401 = vadd.f32 %v1073, %v1400
        %v1402 = vpop.f32.mrb[0].mxu0
        %v1403 = vpop.f32.mrb[0].mxu0
        %v1404 = vadd.f32 %v1073, %v1403
        %v1405 = vpop.f32.mrb[0].mxu0
        %1406 = vmatprep.mubr.bf16.mxu0 0
        %1407 = vmatmul.mubr.bf16.gmra.mrb[0].mxu0 %v409
        %v1408 = vpop.f32.mrb[0].mxu0
        %v1409 = vadd.f32 %v1073, %v1408
        %v1410 = vpop.f32.mrb[0].mxu0
        %v1411 = vpop.f32.mrb[0].mxu0
        %v1412 = vadd.f32 %v1073, %v1411
        %v1413 = vpop.f32.mrb[0].mxu0
        %1414 = vdwg.mxu0
        %v1415 = vld [vmem:[%s317] sm:$0xff]
        %v1416 = vld [vmem:[%s317 + $0x8] sm:$0xff]
        %v1417 = vld [vmem:[%s317 + $0x10] sm:$0xff]
        %v1418 = vld [vmem:[%s317 + $0x18] sm:$0xff]
        %v1419 = vld [vmem:[%s317 + $0x20] sm:$0xff]
        %v1420 = vld [vmem:[%s317 + $0x28] sm:$0xff]
        %v1421 = vld [vmem:[%s317 + $0x30] sm:$0xff]
        %v1422 = vld [vmem:[%s317 + $0x38] sm:$0xff]
        %v1423 = vld [vmem:[%s317 + $0x40] sm:$0xff]
        %v1424 = vld [vmem:[%s317 + $0x48] sm:$0xff]
        %v1425 = vld [vmem:[%s317 + $0x50] sm:$0xff]
        %v1426 = vld [vmem:[%s317 + $0x58] sm:$0xff]
        %v1427 = vld [vmem:[%s317 + $0x60] sm:$0xff]
        %v1428 = vld [vmem:[%s317 + $0x68] sm:$0xff]
        %v1429 = vld [vmem:[%s317 + $0x70] sm:$0xff]
        %v1430 = vld [vmem:[%s317 + $0x78] sm:$0xff]
        %1432 = vset.pattern.permute.xlu0 0
        %1433 = vperm.xlu0 %1432, %v1415
        %v1434 = vpop.permute.xlu0 %1433
        %1437 = vset.pattern.permute.xlu0 0
        %1438 = vperm.xlu0 %1437, %v1416
        %v1439 = vpop.permute.xlu0 %1438
        %1442 = vset.pattern.permute.xlu0 0
        %1443 = vperm.xlu0 %1442, %v1417
        %v1444 = vpop.permute.xlu0 %1443
        %1447 = vset.pattern.permute.xlu0 0
        %1448 = vperm.xlu0 %1447, %v1418
        %v1449 = vpop.permute.xlu0 %1448
        %1452 = vset.pattern.permute.xlu0 0
        %1453 = vperm.xlu0 %1452, %v1419
        %v1454 = vpop.permute.xlu0 %1453
        %1457 = vset.pattern.permute.xlu0 0
        %1458 = vperm.xlu0 %1457, %v1420
        %v1459 = vpop.permute.xlu0 %1458
        %1462 = vset.pattern.permute.xlu0 0
        %1463 = vperm.xlu0 %1462, %v1421
        %v1464 = vpop.permute.xlu0 %1463
        %1467 = vset.pattern.permute.xlu0 0
        %1468 = vperm.xlu0 %1467, %v1422
        %v1469 = vpop.permute.xlu0 %1468
        %1472 = vset.pattern.permute.xlu0 0
        %1473 = vperm.xlu0 %1472, %v1423
        %v1474 = vpop.permute.xlu0 %1473
        %1477 = vset.pattern.permute.xlu0 0
        %1478 = vperm.xlu0 %1477, %v1424
        %v1479 = vpop.permute.xlu0 %1478
        %1482 = vset.pattern.permute.xlu0 0
        %1483 = vperm.xlu0 %1482, %v1425
        %v1484 = vpop.permute.xlu0 %1483
        %1487 = vset.pattern.permute.xlu0 0
        %1488 = vperm.xlu0 %1487, %v1426
        %v1489 = vpop.permute.xlu0 %1488
        %1492 = vset.pattern.permute.xlu0 0
        %1493 = vperm.xlu0 %1492, %v1427
        %v1494 = vpop.permute.xlu0 %1493
        %1497 = vset.pattern.permute.xlu0 0
        %1498 = vperm.xlu0 %1497, %v1428
        %v1499 = vpop.permute.xlu0 %1498
        %1502 = vset.pattern.permute.xlu0 0
        %1503 = vperm.xlu0 %1502, %v1429
        %v1504 = vpop.permute.xlu0 %1503
        %1507 = vset.pattern.permute.xlu0 0
        %1508 = vperm.xlu0 %1507, %v1430
        %v1509 = vpop.permute.xlu0 %1508
        %v1511 = vmul.f32 %v1434, %v1240
        %v1512 = vmul.f32 %v1439, %v1244
        %v1513 = vmul.f32 %v1444, %v1250
        %v1514 = vmul.f32 %v1449, %v1254
        %v1515 = vmul.f32 %v1454, %v1260
        %v1516 = vmul.f32 %v1459, %v1264
        %v1517 = vmul.f32 %v1464, %v1270
        %v1518 = vmul.f32 %v1469, %v1274
        %v1519 = vmul.f32 %v1474, %v1280
        %v1520 = vmul.f32 %v1479, %v1284
        %v1521 = vmul.f32 %v1484, %v1290
        %v1522 = vmul.f32 %v1489, %v1294
        %v1523 = vmul.f32 %v1494, %v1300
        %v1524 = vmul.f32 %v1499, %v1304
        %v1525 = vmul.f32 %v1504, %v1310
        %v1526 = vmul.f32 %v1509, %v1314
        %v1527 = vadd.f32 %v1511, 0.0
        %v1528 = vadd.f32 %v1512, 0.0
        %v1529 = vadd.f32 %v1513, 0.0
        %v1530 = vadd.f32 %v1514, 0.0
        %v1531 = vadd.f32 %v1515, 0.0
        %v1532 = vadd.f32 %v1516, 0.0
        %v1533 = vadd.f32 %v1517, 0.0
        %v1534 = vadd.f32 %v1518, 0.0
        %v1535 = vadd.f32 %v1519, 0.0
        %v1536 = vadd.f32 %v1520, 0.0
        %v1537 = vadd.f32 %v1521, 0.0
        %v1538 = vadd.f32 %v1522, 0.0
        %v1539 = vadd.f32 %v1523, 0.0
        %v1540 = vadd.f32 %v1524, 0.0
        %v1541 = vadd.f32 %v1525, 0.0
        %v1542 = vadd.f32 %v1526, 0.0
        %1543 = vset.pattern.permute.xlu0 1
        %1544 = vperm.xlu0 %1543, %v1415
        %v1545 = vpop.permute.xlu0 %1544
        %1547 = vset.pattern.permute.xlu0 1
        %1548 = vperm.xlu0 %1547, %v1416
        %v1549 = vpop.permute.xlu0 %1548
        %1551 = vset.pattern.permute.xlu0 1
        %1552 = vperm.xlu0 %1551, %v1417
        %v1553 = vpop.permute.xlu0 %1552
        %1555 = vset.pattern.permute.xlu0 1
        %1556 = vperm.xlu0 %1555, %v1418
        %v1557 = vpop.permute.xlu0 %1556
        %1559 = vset.pattern.permute.xlu0 1
        %1560 = vperm.xlu0 %1559, %v1419
        %v1561 = vpop.permute.xlu0 %1560
        %1563 = vset.pattern.permute.xlu0 1
        %1564 = vperm.xlu0 %1563, %v1420
        %v1565 = vpop.permute.xlu0 %1564
        %1567 = vset.pattern.permute.xlu0 1
        %1568 = vperm.xlu0 %1567, %v1421
        %v1569 = vpop.permute.xlu0 %1568
        %1571 = vset.pattern.permute.xlu0 1
        %1572 = vperm.xlu0 %1571, %v1422
        %v1573 = vpop.permute.xlu0 %1572
        %1575 = vset.pattern.permute.xlu0 1
        %1576 = vperm.xlu0 %1575, %v1423
        %v1577 = vpop.permute.xlu0 %1576
        %1579 = vset.pattern.permute.xlu0 1
        %1580 = vperm.xlu0 %1579, %v1424
        %v1581 = vpop.permute.xlu0 %1580
        %1583 = vset.pattern.permute.xlu0 1
        %1584 = vperm.xlu0 %1583, %v1425
        %v1585 = vpop.permute.xlu0 %1584
        %1587 = vset.pattern.permute.xlu0 1
        %1588 = vperm.xlu0 %1587, %v1426
        %v1589 = vpop.permute.xlu0 %1588
        %1591 = vset.pattern.permute.xlu0 1
        %1592 = vperm.xlu0 %1591, %v1427
        %v1593 = vpop.permute.xlu0 %1592
        %1595 = vset.pattern.permute.xlu0 1
        %1596 = vperm.xlu0 %1595, %v1428
        %v1597 = vpop.permute.xlu0 %1596
        %1599 = vset.pattern.permute.xlu0 1
        %1600 = vperm.xlu0 %1599, %v1429
        %v1601 = vpop.permute.xlu0 %1600
        %1603 = vset.pattern.permute.xlu0 1
        %1604 = vperm.xlu0 %1603, %v1430
        %v1605 = vpop.permute.xlu0 %1604
        %v1607 = vmul.f32 %v1545, %v1242
        %v1608 = vmul.f32 %v1549, %v1246
        %v1609 = vmul.f32 %v1553, %v1252
        %v1610 = vmul.f32 %v1557, %v1256
        %v1611 = vmul.f32 %v1561, %v1262
        %v1612 = vmul.f32 %v1565, %v1266
        %v1613 = vmul.f32 %v1569, %v1272
        %v1614 = vmul.f32 %v1573, %v1276
        %v1615 = vmul.f32 %v1577, %v1282
        %v1616 = vmul.f32 %v1581, %v1286
        %v1617 = vmul.f32 %v1585, %v1292
        %v1618 = vmul.f32 %v1589, %v1296
        %v1619 = vmul.f32 %v1593, %v1302
        %v1620 = vmul.f32 %v1597, %v1306
        %v1621 = vmul.f32 %v1601, %v1312
        %v1622 = vmul.f32 %v1605, %v1316
        %v1623 = vadd.f32 %v1527, %v1607
        %v1624 = vadd.f32 %v1528, %v1608
        %v1625 = vadd.f32 %v1529, %v1609
        %v1626 = vadd.f32 %v1530, %v1610
        %v1627 = vadd.f32 %v1531, %v1611
        %v1628 = vadd.f32 %v1532, %v1612
        %v1629 = vadd.f32 %v1533, %v1613
        %v1630 = vadd.f32 %v1534, %v1614
        %v1631 = vadd.f32 %v1535, %v1615
        %v1632 = vadd.f32 %v1536, %v1616
        %v1633 = vadd.f32 %v1537, %v1617
        %v1634 = vadd.f32 %v1538, %v1618
        %v1635 = vadd.f32 %v1539, %v1619
        %v1636 = vadd.f32 %v1540, %v1620
        %v1637 = vadd.f32 %v1541, %v1621
        %v1638 = vadd.f32 %v1542, %v1622
        %1639 = vset.pattern.permute.xlu0 2
        %1640 = vperm.xlu0 %1639, %v1415
        %v1641 = vpop.permute.xlu0 %1640
        %1643 = vset.pattern.permute.xlu0 2
        %1644 = vperm.xlu0 %1643, %v1416
        %v1645 = vpop.permute.xlu0 %1644
        %1647 = vset.pattern.permute.xlu0 2
        %1648 = vperm.xlu0 %1647, %v1417
        %v1649 = vpop.permute.xlu0 %1648
        %1651 = vset.pattern.permute.xlu0 2
        %1652 = vperm.xlu0 %1651, %v1418
        %v1653 = vpop.permute.xlu0 %1652
        %1655 = vset.pattern.permute.xlu0 2
        %1656 = vperm.xlu0 %1655, %v1419
        %v1657 = vpop.permute.xlu0 %1656
        %1659 = vset.pattern.permute.xlu0 2
        %1660 = vperm.xlu0 %1659, %v1420
        %v1661 = vpop.permute.xlu0 %1660
        %1663 = vset.pattern.permute.xlu0 2
        %1664 = vperm.xlu0 %1663, %v1421
        %v1665 = vpop.permute.xlu0 %1664
        %1667 = vset.pattern.permute.xlu0 2
        %1668 = vperm.xlu0 %1667, %v1422
        %v1669 = vpop.permute.xlu0 %1668
        %1671 = vset.pattern.permute.xlu0 2
        %1672 = vperm.xlu0 %1671, %v1423
        %v1673 = vpop.permute.xlu0 %1672
        %1675 = vset.pattern.permute.xlu0 2
        %1676 = vperm.xlu0 %1675, %v1424
        %v1677 = vpop.permute.xlu0 %1676
        %1679 = vset.pattern.permute.xlu0 2
        %1680 = vperm.xlu0 %1679, %v1425
        %v1681 = vpop.permute.xlu0 %1680
        %1683 = vset.pattern.permute.xlu0 2
        %1684 = vperm.xlu0 %1683, %v1426
        %v1685 = vpop.permute.xlu0 %1684
        %1687 = vset.pattern.permute.xlu0 2
        %1688 = vperm.xlu0 %1687, %v1427
        %v1689 = vpop.permute.xlu0 %1688
        %1691 = vset.pattern.permute.xlu0 2
        %1692 = vperm.xlu0 %1691, %v1428
        %v1693 = vpop.permute.xlu0 %1692
        %1695 = vset.pattern.permute.xlu0 2
        %1696 = vperm.xlu0 %1695, %v1429
        %v1697 = vpop.permute.xlu0 %1696
        %1699 = vset.pattern.permute.xlu0 2
        %1700 = vperm.xlu0 %1699, %v1430
        %v1701 = vpop.permute.xlu0 %1700
        %v1703 = vmul.f32 %v1641, %v1353
        %v1704 = vmul.f32 %v1645, %v1356
        %v1705 = vmul.f32 %v1649, %v1361
        %v1706 = vmul.f32 %v1653, %v1364
        %v1707 = vmul.f32 %v1657, %v1369
        %v1708 = vmul.f32 %v1661, %v1372
        %v1709 = vmul.f32 %v1665, %v1377
        %v1710 = vmul.f32 %v1669, %v1380
        %v1711 = vmul.f32 %v1673, %v1385
        %v1712 = vmul.f32 %v1677, %v1388
        %v1713 = vmul.f32 %v1681, %v1393
        %v1714 = vmul.f32 %v1685, %v1396
        %v1715 = vmul.f32 %v1689, %v1401
        %v1716 = vmul.f32 %v1693, %v1404
        %v1717 = vmul.f32 %v1697, %v1409
        %v1718 = vmul.f32 %v1701, %v1412
        %v1719 = vadd.f32 %v1623, %v1703
        %v1720 = vadd.f32 %v1624, %v1704
        %v1721 = vadd.f32 %v1625, %v1705
        %v1722 = vadd.f32 %v1626, %v1706
        %v1723 = vadd.f32 %v1627, %v1707
        %v1724 = vadd.f32 %v1628, %v1708
        %v1725 = vadd.f32 %v1629, %v1709
        %v1726 = vadd.f32 %v1630, %v1710
        %v1727 = vadd.f32 %v1631, %v1711
        %v1728 = vadd.f32 %v1632, %v1712
        %v1729 = vadd.f32 %v1633, %v1713
        %v1730 = vadd.f32 %v1634, %v1714
        %v1731 = vadd.f32 %v1635, %v1715
        %v1732 = vadd.f32 %v1636, %v1716
        %v1733 = vadd.f32 %v1637, %v1717
        %v1734 = vadd.f32 %v1638, %v1718
        %1735 = vst [vmem:[%s311] sm:$0xff] %v1719
        %1736 = vst [vmem:[%s311 + $0x8] sm:$0xff] %v1720
        %1737 = vst [vmem:[%s311 + $0x10] sm:$0xff] %v1721
        %1738 = vst [vmem:[%s311 + $0x18] sm:$0xff] %v1722
        %1739 = vst [vmem:[%s311 + $0x20] sm:$0xff] %v1723
        %1740 = vst [vmem:[%s311 + $0x28] sm:$0xff] %v1724
        %1741 = vst [vmem:[%s311 + $0x30] sm:$0xff] %v1725
        %1742 = vst [vmem:[%s311 + $0x38] sm:$0xff] %v1726
        %1743 = vst [vmem:[%s311 + $0x40] sm:$0xff] %v1727
        %1744 = vst [vmem:[%s311 + $0x48] sm:$0xff] %v1728
        %1745 = vst [vmem:[%s311 + $0x50] sm:$0xff] %v1729
        %1746 = vst [vmem:[%s311 + $0x58] sm:$0xff] %v1730
        %1747 = vst [vmem:[%s311 + $0x60] sm:$0xff] %v1731
        %1748 = vst [vmem:[%s311 + $0x68] sm:$0xff] %v1732
        %1749 = vst [vmem:[%s311 + $0x70] sm:$0xff] %v1733
        %1750 = vst [vmem:[%s311 + $0x78] sm:$0xff] %v1734
        %s1751 = sand.u32 %s151, 1
        %s1752 = scalar_lea.sflag [#allocation4], %s1751
        %s1753 = sand.u32 %s151, 1
        %s1754 = smul.addr %s1753, 256
        %s1755 = scalar_lea.vmem [#allocation7], %s1754
        %s1756 = sand.u32 %s177, 1
        %s1757 = scalar_lea.sflag [#allocation9], %s1756
        %s1758 = sand.u32 %s177, 1
        %s1759 = smul.addr %s1758, 128
        %s1760 = scalar_lea.vmem [#allocation8], %s1759
        // Predicated region
        $region49: #{tpu_custom_call.1} parent=39 // pred_check
          %p1761 = pneg %p161
        $region50: #{tpu_custom_call.1} parent=39 // pred_check_branch
          %1763 = sbr.rel (%p1761) target = $region52
        $region51: #{tpu_custom_call.1} parent=39 // pred_region
          %s1764 = smul.u32 16, %s28
          %s1766 = ssub.s32 4096, 4096
          %1767 = vsyncadd %s1752, %s1766
          %s1768 = smul.addr %s1764, 4
          %s1769 = smul.addr %s1768, 64
          %s1770 = scalar_lea.hbm %s5, %s1769
          %s1771 = sshll.u32 %s1755, 4
          %s1772 = int_to_ptr.vmem [resolvable:$true] %s1771
          %1777 = dma.vmem_to_hbm [thread:$0]  %s1772, 4096, %s1770, %s1752, 256, 256, 16
        $region52: #{tpu_custom_call.1} parent=39 // pred_fallthru
          _
        // Predicated region
        $region53: #{tpu_custom_call.1} parent=39 // pred_check
          %p1778 = pneg %p187
        $region54: #{tpu_custom_call.1} parent=39 // pred_check_branch
          %1780 = sbr.rel (%p1778) target = $region56
        $region55: #{tpu_custom_call.1} parent=39 // pred_region
          %s1781 = smul.u32 16, %s28
          %s1783 = ssub.s32 2048, 2048
          %1784 = vsyncadd %s1757, %s1783
          %s1785 = smul.addr %s1781, 128
          %s1786 = scalar_lea.hbm %s6, %s1785
          %s1787 = sshll.u32 %s1760, 4
          %s1788 = int_to_ptr.vmem [resolvable:$true] %s1787
          %1793 = dma.vmem_to_hbm [thread:$0]  %s1788, 2048, %s1786, %s1757, 128, 128, 8
        $region56: #{tpu_custom_call.1} parent=39 // pred_fallthru
          _
      $region40: #{tpu_custom_call.1} parent=5 // pred_fallthru
        _
      %p1794 = scmp.le.s32.totalorder 2, %s23
      // Predicated region
      $region57: #{tpu_custom_call.1} parent=5 // pred_check
        %p1795 = pneg %p1794
      $region58: #{tpu_custom_call.1} parent=5 // pred_check_branch
        %1797 = sbr.rel (%p1795) target = $region60
      $region59: #{tpu_custom_call.1} parent=5 // pred_region
        %s1798 = ssub.s32 %s23, 2
        // Predicated region
        $region61: #{tpu_custom_call.1} parent=59 // pred_check
          %p1799 = pneg %p167
        $region62: #{tpu_custom_call.1} parent=59 // pred_check_branch
          %1801 = sbr.rel (%p1799) target = $region64
        $region63: #{tpu_custom_call.1} parent=59 // pred_region
          %s1802 = sand.u32 %s152, 1
          %s1803 = scalar_lea.sflag [#allocation4], %s1802
          %s1804 = sand.u32 %s152, 1
          %s1805 = smul.addr %s1804, 256
          %s1806 = scalar_lea.vmem [#allocation7], %s1805
          %1807 = dma.done %s1803, 4096
        $region64: #{tpu_custom_call.1} parent=59 // pred_fallthru
          _
        // Predicated region
        $region65: #{tpu_custom_call.1} parent=59 // pred_check
          %p1808 = pneg %p193
        $region66: #{tpu_custom_call.1} parent=59 // pred_check_branch
          %1810 = sbr.rel (%p1808) target = $region68
        $region67: #{tpu_custom_call.1} parent=59 // pred_region
          %s1811 = sand.u32 %s178, 1
          %s1812 = scalar_lea.sflag [#allocation9], %s1811
          %s1813 = sand.u32 %s178, 1
          %s1814 = smul.addr %s1813, 128
          %s1815 = scalar_lea.vmem [#allocation8], %s1814
          %1816 = dma.done %s1812, 2048
        $region68: #{tpu_custom_call.1} parent=59 // pred_fallthru
          _
      $region60: #{tpu_custom_call.1} parent=5 // pred_fallthru
        _
    $region6: #{tpu_custom_call.1} parent=1 // loop_footer
      %s27 = sadd.s32 1, %s23
    $region7: #{tpu_custom_call.1} parent=1 // loop_footer_branch
      %22 = sbr.rel target = $region3
    $region8: #{tpu_custom_call.1} parent=1 // loop_exit
      _
    %1817 = vsyncpa [#allocation3], 1
    %s1818 = scalar_lea.sflag [#allocation3], 1
    %1819 = vsyncpa %s1818, 1
    %1820 = vsyncpa [#allocation6], 1
    %1821 = vsyncpa [#allocation4], 1
    %s1822 = scalar_lea.sflag [#allocation4], 1
    %1823 = vsyncpa %s1822, 1
    %1824 = vsyncpa [#allocation9], 1
    %s1825 = scalar_lea.sflag [#allocation9], 1
    %1826 = vsyncpa %s1825, 1

</llo_original>
